<compile_context>
chip_gen: v6e
topology: v6e:2x2x1
jax: 0.10.0
libtpu: 0.0.40
codegen_flags: <defaults>
</compile_context>

<pallas_src>
import math
import functools

import numpy as np
import jax
import jax.numpy as jnp
from jax.experimental import pallas as pl
from jax.experimental.pallas import tpu as pltpu


# ------------- deterministic parameter / buffer construction (host glue) -------------

def hann_window(n):
    # torch.hann_window default (periodic=True): 0.5 - 0.5*cos(2*pi*k/n)
    k = np.arange(n)
    return (0.5 - 0.5 * np.cos(2.0 * np.pi * k / n)).astype(np.float32)


def gaussian_windows(n_extra, n_win):
    # GaussianWindows.__init__ defaults: sigma = sigmoid(-1), center = i/(n+1)
    sigma = np.full((n_extra,), 1.0 / (1.0 + np.exp(1.0)), dtype=np.float64)
    center = np.arange(1, n_extra + 1, dtype=np.float64) / (n_extra + 1)
    x = np.arange(n_win, dtype=np.float64)[:, None]
    Y = np.exp(-0.5 * ((x - n_win * center[None, :]) / (sigma[None, :] * n_win / 2.0)) ** 2)
    return Y.astype(np.float32)                          # (n_win, n_extra)


def melscale_fbanks(n_freqs, f_min, f_max, n_mels, sample_rate):
    # torchaudio.functional.melscale_fbanks defaults: mel_scale="htk", norm=None
    def hz_to_mel(f):
        return 2595.0 * np.log10(1.0 + f / 700.0)

    def mel_to_hz(m):
        return 700.0 * (10.0 ** (m / 2595.0) - 1.0)

    all_freqs = np.linspace(0.0, sample_rate // 2, n_freqs)
    m_pts = np.linspace(hz_to_mel(f_min), hz_to_mel(f_max), n_mels + 2)
    f_pts = mel_to_hz(m_pts)
    f_diff = f_pts[1:] - f_pts[:-1]
    slopes = f_pts[None, :] - all_freqs[:, None]          # (n_freqs, n_mels+2)
    down = (-slopes[:, :-2]) / f_diff[:-1]
    up = slopes[:, 2:] / f_diff[1:]
    fb = np.maximum(0.0, np.minimum(down, up))
    return fb.astype(np.float32)                          # (n_freqs, n_mels)


def rfft_matrices(n):
    # rfft(norm='ortho') as x @ (C + i*S): C=cos(2*pi*m*k/n)/sqrt(n), S=-sin(...)/sqrt(n)
    m = np.arange(n, dtype=np.float64)[:, None]
    k = np.arange(n // 2 + 1, dtype=np.float64)[None, :]
    ang = 2.0 * np.pi * m * k / n
    scale = 1.0 / np.sqrt(n)
    return (np.cos(ang) * scale).astype(np.float32), (-np.sin(ang) * scale).astype(np.float32)


def _round_up(a, b):
    return (a + b - 1) // b * b


def build_channel_weights(wins, cos_m, sin_m, n_f_pad):
    """Fold each channel's window into the rfft matrices: (nC, N, 2*nFp) with
    per-channel-contiguous [re_c | im_c] layout (so the first matmul can be done
    one channel at a time with a small live intermediate)."""
    nC, N = wins.shape
    nF = cos_m.shape[1]
    w = np.zeros((nC, N, 2 * n_f_pad), np.float32)
    for c in range(nC):
        w[c, :, :nF] = wins[c][:, None] * cos_m
        w[c, :, n_f_pad:n_f_pad + nF] = wins[c][:, None] * sin_m
    return w


def pad_fbanks(fb, n_f_pad, n_m_pad):
    nF, nM = fb.shape
    out = np.zeros((n_f_pad, n_m_pad), np.float32)
    out[:nF, :nM] = fb
    return out


# ----------------------------------- Pallas kernel -----------------------------------

def _mel_kernel(frames_ref, w_ref, fb_ref, out_ref, *, nc_blk, nFp, nMp, log, eps,
                inv_neg_log_eps):
    # frames_ref: (TM, N)             f32 or bf16
    # w_ref:      (nc_blk, N, 2*nFp)  bf16  (window folded into rfft cos | -sin)
    # fb_ref:     (nFp, nMp)          bf16
    # out_ref:    (TM, nc_blk*nMp)    out dtype (lane-dense, multiple of 128)
    x = frames_ref[...]
    if x.dtype != jnp.bfloat16:
        x = x.astype(jnp.bfloat16)                        # in-register cast (no HBM trip)
    for cc in range(nc_blk):                              # static, tiny nC
        # windowed rfft (re | im) for this channel: one MXU matmul
        y = jnp.dot(x, w_ref[cc], preferred_element_type=jnp.float32)   # (TM, 2*nFp)
        re = y[:, :nFp]
        im = y[:, nFp:]
        power = re * re + im * im                                       # |rfft|^2, f32 VPU
        mel = jnp.dot(power.astype(jnp.bfloat16), fb_ref[...],
                      preferred_element_type=jnp.float32)               # (TM, nMp)
        if log:
            mel = (jnp.log(mel + eps) - math.log(eps)) * inv_neg_log_eps
        out_ref[:, cc * nMp:(cc + 1) * nMp] = mel.astype(out_ref.dtype)  # lane-dense store


_VMEM_BUDGET = 48 * 1024 * 1024   # conservatively below v7x's 64 MiB physical VMEM


def mel_spectrum_forward(frames, w3d_bf16, fb_pad_bf16, *, nC, n_mels, log=False,
                         eps=1e-5, out_dtype=jnp.bfloat16):
    B, T, N = frames.shape
    assert w3d_bf16.shape[0] == nC and w3d_bf16.shape[1] == N
    nFp, nMp = fb_pad_bf16.shape
    twoF = 2 * nFp
    M = B * T
    # No wrapper-side dtype cast (a standalone cast would add an HBM round-trip).
    x2d = frames.reshape(M, N)

    # M-tile: 512 by default, 256 for large windows; multiple of 8 sublanes.
    TM = 256 if N >= 2048 else 512
    TM = min(TM, _round_up(M, 8))
    Mp = _round_up(M, TM)
    if Mp != M:
        x2d = jnp.pad(x2d, ((0, Mp - M), (0, 0)))

    in_bytes = x2d.dtype.itemsize
    out_bytes = np.dtype(out_dtype).itemsize
    w_chan_bytes = N * twoF * 2                           # one channel's bf16 weight block

    def footprint(ncb):
        return (2 * TM * N * in_bytes                     # frames tile, double-buffered
                + ncb * w_chan_bytes                      # weight block, single-buffered
                + nFp * nMp * 2                           # fb, single-buffered
                + 2 * TM * ncb * nMp * out_bytes          # output tile, double-buffered
                + TM * (twoF * 4 + nFp * 6 + nMp * 4))    # y / power / power_bf16 / mel temps

    # All channels resident if they fit the budget; otherwise one channel per OUTER
    # grid step (frames re-streamed nC times; weights never re-streamed per M tile).
    nc_blk = nC if footprint(nC) <= _VMEM_BUDGET else 1
    n_cblk_grid = nC // nc_blk
    # TODO(synk): if even a single channel's (N, 2*nFp) weight block overflows the
    # budget (extremely large windowSize), K-tile the first matmul with an accumulator.

    vmem_limit = int(min(64 * 1024 * 1024, max(32 * 1024 * 1024, 2 * footprint(nc_blk))))

    kernel = functools.partial(_mel_kernel, nc_blk=nc_blk, nFp=nFp, nMp=nMp, log=log,
                               eps=eps, inv_neg_log_eps=1.0 / (-math.log(eps)))

    flops = nC * (2 * Mp * N * twoF + 2 * Mp * nFp * nMp)
    bytes_accessed = (n_cblk_grid * Mp * N * in_bytes + nC * w_chan_bytes
                      + nFp * nMp * 2 + Mp * nC * nMp * out_bytes)
    cost = pl.CostEstimate(flops=flops,
                           transcendentals=Mp * nC * nMp if log else 0,
                           bytes_accessed=bytes_accessed)

    def build(single_buffer_weights):
        if single_buffer_weights:
            # Resident operands don't need a second pipeline buffer.
            w_spec = pl.BlockSpec((nc_blk, N, twoF), lambda c, i: (c, 0, 0),
                                  pipeline_mode=pl.Buffered(1))
            fb_spec = pl.BlockSpec((nFp, nMp), lambda c, i: (0, 0),
                                   pipeline_mode=pl.Buffered(1))
        else:
            w_spec = pl.BlockSpec((nc_blk, N, twoF), lambda c, i: (c, 0, 0))
            fb_spec = pl.BlockSpec((nFp, nMp), lambda c, i: (0, 0))
        return pl.pallas_call(
            kernel,
            out_shape=jax.ShapeDtypeStruct((Mp, nC * nMp), out_dtype),
            grid=(n_cblk_grid, Mp // TM),
            in_specs=[
                pl.BlockSpec((TM, N), lambda c, i: (i, 0)),   # frames tile
                w_spec,                                        # per-channel fused weights
                fb_spec,                                       # padded mel filterbank
            ],
            out_specs=pl.BlockSpec((TM, nc_blk * nMp), lambda c, i: (i, c)),
            compiler_params=pltpu.CompilerParams(
                dimension_semantics=("parallel", "parallel"),
                vmem_limit_bytes=vmem_limit),
            cost_estimate=cost,
        )

    try:
        out = build(True)(x2d, w3d_bf16, fb_pad_bf16)
    except Exception:
        # Fallback for JAX versions without pipeline_mode=pl.Buffered(1): default
        # double-buffered pipelining (correct, just a larger VMEM footprint).
        out = build(False)(x2d, w3d_bf16, fb_pad_bf16)

    # (Mp, nC*nMp) -> (B, T, nC, nMp) -> slice mel pad -> (B, T, n_mels, nC)
    out = out[:M].reshape(B, T, nC, nMp)[..., :n_mels]
    # TODO(synk): toMono (mean over dim=-4, default False) not exercised; trivial JAX glue.
    return out.transpose(0, 1, 3, 2)


# -------------------------------- pure-JAX reference --------------------------------

def reference(frames, wins, fb, *, log=False, eps=1e-5):
    spec = jnp.fft.rfft(frames[..., None, :] * wins, norm="ortho")   # (B,T,nC,nF) complex
    spec = jnp.swapaxes(spec, -1, -2)                                # (B,T,nF,nC)
    power = jnp.abs(spec) ** 2
    mel = jnp.swapaxes(jnp.swapaxes(power, -1, -2) @ fb, -1, -2)     # (B,T,n_mels,nC)
    if log:
        mel = (jnp.log(mel + eps) - math.log(eps)) / (-math.log(eps))
    return mel


if __name__ == "__main__":
    windowSize = 16
    nExtraWins = 2
    n_mels = 8
    fs = 8000
    f_min, f_max = 0.0, 4000.0
    B, T = 2, 8

    nC = nExtraWins + 1
    nF = windowSize // 2 + 1
    nFp = _round_up(nF, 128)
    nMp = _round_up(n_mels, 128)
    # TODO(synk): for demo-scale nF / n_mels << 128, pack all channels before padding
    # (block-diagonal fb) to avoid mostly-zero lanes; irrelevant at production sizes.

    hann = hann_window(windowSize)                                   # (16,)
    gwins = gaussian_windows(nExtraWins, windowSize)                 # (16, 2)
    wins = np.concatenate([hann[None, :], gwins.T], axis=0)          # (3, 16)
    fb = melscale_fbanks(nF, f_min, f_max, n_mels, fs)               # (9, 8)
    cos_m, sin_m = rfft_matrices(windowSize)                         # (16, 9) each

    w3d = build_channel_weights(wins, cos_m, sin_m, nFp)             # (3, 16, 256)
    fb_pad = pad_fbanks(fb, nFp, nMp)                                # (128, 128)

    key = jax.random.PRNGKey(0)
    frames = jax.random.normal(key, (B, T, windowSize), dtype=jnp.float32)

    w3d_j = jnp.asarray(w3d, dtype=jnp.bfloat16)
    fb_pad_j = jnp.asarray(fb_pad, dtype=jnp.bfloat16)

    out = mel_spectrum_forward(frames, w3d_j, fb_pad_j, nC=nC, n_mels=n_mels,
                               log=False, eps=1e-5, out_dtype=jnp.bfloat16)
    out = jax.block_until_ready(out)

    ref = reference(frames, jnp.asarray(wins), jnp.asarray(fb), log=False, eps=1e-5)
    assert out.shape == (B, T, n_mels, nC), out.shape
    np.testing.assert_allclose(np.asarray(out.astype(jnp.float32)), np.asarray(ref),
                               rtol=5e-2, atol=5e-3)
    print("KERNEL_OK")
</pallas_src>

<mosaic_0001>
module attributes {stable_mosaic.version = 11 : i64} {
  func.func @_mel_kernel(%arg0: i32, %arg1: i32, %arg2: memref<16x16xf32, #tpu.memory_space<vmem>>, %arg3: memref<3x16x256xbf16, #tpu.memory_space<vmem>>, %arg4: memref<128x128xbf16, #tpu.memory_space<vmem>>, %arg5: memref<16x384xbf16, #tpu.memory_space<vmem>>) attributes {dimension_semantics = [#tpu.dimension_semantics<parallel>, #tpu.dimension_semantics<parallel>], iteration_bounds = array<i64: 1, 1>, scalar_prefetch = 0 : i64, scratch_operands = 0 : i64, tpu.core_type = #tpu.core_type<tc>, window_params = [{transform_indices = @transform_0, window_bounds = array<i64: 16, 16>}, {pipeline_mode = #tpu.pipeline_mode<synchronous>, transform_indices = @transform_1, window_bounds = array<i64: 3, 16, 256>}, {pipeline_mode = #tpu.pipeline_mode<synchronous>, transform_indices = @transform_2, window_bounds = array<i64: 128, 128>}, {transform_indices = @transform_3, window_bounds = array<i64: 16, 384>}]} {
    %c0 = arith.constant 0 : index
    %c0_0 = arith.constant 0 : index
    %0 = vector.load %arg2[%c0, %c0_0] : memref<16x16xf32, #tpu.memory_space<vmem>>, vector<16x16xf32>
    %1 = arith.truncf %0 : vector<16x16xf32> to vector<16x16xbf16>
    %c0_1 = arith.constant 0 : index
    %c0_2 = arith.constant 0 : index
    %c0_3 = arith.constant 0 : index
    %2 = vector.load %arg3[%c0_1, %c0_2, %c0_3] : memref<3x16x256xbf16, #tpu.memory_space<vmem>>, vector<1x16x256xbf16>
    %3 = vector.shape_cast %2 : vector<1x16x256xbf16> to vector<16x256xbf16>
    %cst = arith.constant dense<0.000000e+00> : vector<16x256xf32>
    %4 = tpu.matmul %1, %3, %cst {dimension_numbers = #tpu.dot_dimension_numbers<[1], [0], [0], [1], [0, 0, 1, 1], [], []>} : vector<16x16xbf16>, vector<16x256xbf16>, vector<16x256xf32> -> vector<16x256xf32>
    %5 = vector.extract_strided_slice %4 {offsets = [0, 0], sizes = [16, 128], strides = [1, 1]} : vector<16x256xf32> to vector<16x128xf32>
    %6 = vector.extract_strided_slice %4 {offsets = [0, 128], sizes = [16, 128], strides = [1, 1]} : vector<16x256xf32> to vector<16x128xf32>
    %7 = arith.mulf %5, %5 : vector<16x128xf32>
    %8 = arith.mulf %6, %6 : vector<16x128xf32>
    %9 = arith.addf %7, %8 : vector<16x128xf32>
    %10 = arith.truncf %9 : vector<16x128xf32> to vector<16x128xbf16>
    %c0_4 = arith.constant 0 : index
    %c0_5 = arith.constant 0 : index
    %11 = vector.load %arg4[%c0_4, %c0_5] : memref<128x128xbf16, #tpu.memory_space<vmem>>, vector<128x128xbf16>
    %cst_6 = arith.constant dense<0.000000e+00> : vector<16x128xf32>
    %12 = tpu.matmul %10, %11, %cst_6 {dimension_numbers = #tpu.dot_dimension_numbers<[1], [0], [0], [1], [0, 0, 1, 1], [], []>} : vector<16x128xbf16>, vector<128x128xbf16>, vector<16x128xf32> -> vector<16x128xf32>
    %13 = arith.truncf %12 : vector<16x128xf32> to vector<16x128xbf16>
    %c0_7 = arith.constant 0 : index
    %c0_8 = arith.constant 0 : index
    %14 = vector.load %arg5[%c0_7, %c0_8] : memref<16x384xbf16, #tpu.memory_space<vmem>>, vector<16x128xbf16>
    tpu.vector_store %arg5[%c0_7, %c0_8], %13 {strides = array<i32>} : memref<16x384xbf16, #tpu.memory_space<vmem>>, vector<16x128xbf16>,
    %c1 = arith.constant 1 : index
    %c0_9 = arith.constant 0 : index
    %c0_10 = arith.constant 0 : index
    %15 = vector.load %arg3[%c1, %c0_9, %c0_10] : memref<3x16x256xbf16, #tpu.memory_space<vmem>>, vector<1x16x256xbf16>
    %16 = vector.shape_cast %15 : vector<1x16x256xbf16> to vector<16x256xbf16>
    %cst_11 = arith.constant dense<0.000000e+00> : vector<16x256xf32>
    %17 = tpu.matmul %1, %16, %cst_11 {dimension_numbers = #tpu.dot_dimension_numbers<[1], [0], [0], [1], [0, 0, 1, 1], [], []>} : vector<16x16xbf16>, vector<16x256xbf16>, vector<16x256xf32> -> vector<16x256xf32>
    %18 = vector.extract_strided_slice %17 {offsets = [0, 0], sizes = [16, 128], strides = [1, 1]} : vector<16x256xf32> to vector<16x128xf32>
    %19 = vector.extract_strided_slice %17 {offsets = [0, 128], sizes = [16, 128], strides = [1, 1]} : vector<16x256xf32> to vector<16x128xf32>
    %20 = arith.mulf %18, %18 : vector<16x128xf32>
    %21 = arith.mulf %19, %19 : vector<16x128xf32>
    %22 = arith.addf %20, %21 : vector<16x128xf32>
    %23 = arith.truncf %22 : vector<16x128xf32> to vector<16x128xbf16>
    %c0_12 = arith.constant 0 : index
    %c0_13 = arith.constant 0 : index
    %24 = vector.load %arg4[%c0_12, %c0_13] : memref<128x128xbf16, #tpu.memory_space<vmem>>, vector<128x128xbf16>
    %cst_14 = arith.constant dense<0.000000e+00> : vector<16x128xf32>
    %25 = tpu.matmul %23, %24, %cst_14 {dimension_numbers = #tpu.dot_dimension_numbers<[1], [0], [0], [1], [0, 0, 1, 1], [], []>} : vector<16x128xbf16>, vector<128x128xbf16>, vector<16x128xf32> -> vector<16x128xf32>
    %26 = arith.truncf %25 : vector<16x128xf32> to vector<16x128xbf16>
    %c0_15 = arith.constant 0 : index
    %c128 = arith.constant 128 : index
    %27 = vector.load %arg5[%c0_15, %c128] : memref<16x384xbf16, #tpu.memory_space<vmem>>, vector<16x128xbf16>
    tpu.vector_store %arg5[%c0_15, %c128], %26 {strides = array<i32>} : memref<16x384xbf16, #tpu.memory_space<vmem>>, vector<16x128xbf16>,
    %c2 = arith.constant 2 : index
    %c0_16 = arith.constant 0 : index
    %c0_17 = arith.constant 0 : index
    %28 = vector.load %arg3[%c2, %c0_16, %c0_17] : memref<3x16x256xbf16, #tpu.memory_space<vmem>>, vector<1x16x256xbf16>
    %29 = vector.shape_cast %28 : vector<1x16x256xbf16> to vector<16x256xbf16>
    %cst_18 = arith.constant dense<0.000000e+00> : vector<16x256xf32>
    %30 = tpu.matmul %1, %29, %cst_18 {dimension_numbers = #tpu.dot_dimension_numbers<[1], [0], [0], [1], [0, 0, 1, 1], [], []>} : vector<16x16xbf16>, vector<16x256xbf16>, vector<16x256xf32> -> vector<16x256xf32>
    %31 = vector.extract_strided_slice %30 {offsets = [0, 0], sizes = [16, 128], strides = [1, 1]} : vector<16x256xf32> to vector<16x128xf32>
    %32 = vector.extract_strided_slice %30 {offsets = [0, 128], sizes = [16, 128], strides = [1, 1]} : vector<16x256xf32> to vector<16x128xf32>
    %33 = arith.mulf %31, %31 : vector<16x128xf32>
    %34 = arith.mulf %32, %32 : vector<16x128xf32>
    %35 = arith.addf %33, %34 : vector<16x128xf32>
    %36 = arith.truncf %35 : vector<16x128xf32> to vector<16x128xbf16>
    %c0_19 = arith.constant 0 : index
    %c0_20 = arith.constant 0 : index
    %37 = vector.load %arg4[%c0_19, %c0_20] : memref<128x128xbf16, #tpu.memory_space<vmem>>, vector<128x128xbf16>
    %cst_21 = arith.constant dense<0.000000e+00> : vector<16x128xf32>
    %38 = tpu.matmul %36, %37, %cst_21 {dimension_numbers = #tpu.dot_dimension_numbers<[1], [0], [0], [1], [0, 0, 1, 1], [], []>} : vector<16x128xbf16>, vector<128x128xbf16>, vector<16x128xf32> -> vector<16x128xf32>
    %39 = arith.truncf %38 : vector<16x128xf32> to vector<16x128xbf16>
    %c0_22 = arith.constant 0 : index
    %c256 = arith.constant 256 : index
    %40 = vector.load %arg5[%c0_22, %c256] : memref<16x384xbf16, #tpu.memory_space<vmem>>, vector<16x128xbf16>
    tpu.vector_store %arg5[%c0_22, %c256], %39 {strides = array<i32>} : memref<16x384xbf16, #tpu.memory_space<vmem>>, vector<16x128xbf16>,
    return
  }
  func.func @transform_0(%arg0: i32, %arg1: i32) -> (i32, i32) {
    %c0_i32 = arith.constant 0 : i32
    %c0_i32_0 = arith.constant 0 : i32
    return %arg1, %c0_i32 : i32, i32
  }
  func.func @transform_1(%arg0: i32, %arg1: i32) -> (i32, i32, i32) {
    %c0_i32 = arith.constant 0 : i32
    %c0_i32_0 = arith.constant 0 : i32
    %c0_i32_1 = arith.constant 0 : i32
    return %arg0, %c0_i32, %c0_i32_0 : i32, i32, i32
  }
  func.func @transform_2(%arg0: i32, %arg1: i32) -> (i32, i32) {
    %c0_i32 = arith.constant 0 : i32
    %c0_i32_0 = arith.constant 0 : i32
    %c0_i32_1 = arith.constant 0 : i32
    return %c0_i32, %c0_i32_0 : i32, i32
  }
  func.func @transform_3(%arg0: i32, %arg1: i32) -> (i32, i32) {
    %c0_i32 = arith.constant 0 : i32
    return %arg1, %arg0 : i32, i32
  }
}

module attributes {stable_mosaic.version = 11 : i64} {
  func.func @_mel_kernel(%arg0: i32, %arg1: i32, %arg2: memref<16x16xf32, #tpu.memory_space<vmem>>, %arg3: memref<3x16x256xbf16, #tpu.memory_space<vmem>>, %arg4: memref<128x128xbf16, #tpu.memory_space<vmem>>, %arg5: memref<16x384xbf16, #tpu.memory_space<vmem>>) attributes {dimension_semantics = [#tpu.dimension_semantics<parallel>, #tpu.dimension_semantics<parallel>], iteration_bounds = array<i64: 1, 1>, scalar_prefetch = 0 : i64, scratch_operands = 0 : i64, tpu.core_type = #tpu.core_type<tc>, window_params = [{transform_indices = @transform_0, window_bounds = array<i64: 16, 16>}, {transform_indices = @transform_1, window_bounds = array<i64: 3, 16, 256>}, {pipeline_mode = #tpu.pipeline_mode<synchronous>, transform_indices = @transform_2, window_bounds = array<i64: 128, 128>}, {transform_indices = @transform_3, window_bounds = array<i64: 16, 384>}]} {
    %c0 = arith.constant 0 : index
    %c0_0 = arith.constant 0 : index
    %0 = vector.load %arg2[%c0, %c0_0] : memref<16x16xf32, #tpu.memory_space<vmem>>, vector<16x16xf32>
    %1 = arith.truncf %0 : vector<16x16xf32> to vector<16x16xbf16>
    %c0_1 = arith.constant 0 : index
    %c0_2 = arith.constant 0 : index
    %c0_3 = arith.constant 0 : index
    %2 = vector.load %arg3[%c0_1, %c0_2, %c0_3] : memref<3x16x256xbf16, #tpu.memory_space<vmem>>, vector<1x16x256xbf16>
    %3 = vector.shape_cast %2 : vector<1x16x256xbf16> to vector<16x256xbf16>
    %cst = arith.constant dense<0.000000e+00> : vector<16x256xf32>
    %4 = tpu.matmul %1, %3, %cst {dimension_numbers = #tpu.dot_dimension_numbers<[1], [0], [0], [1], [0, 0, 1, 1], [], []>} : vector<16x16xbf16>, vector<16x256xbf16>, vector<16x256xf32> -> vector<16x256xf32>
    %5 = vector.extract_strided_slice %4 {offsets = [0, 0], sizes = [16, 128], strides = [1, 1]} : vector<16x256xf32> to vector<16x128xf32>
    %6 = vector.extract_strided_slice %4 {offsets = [0, 128], sizes = [16, 128], strides = [1, 1]} : vector<16x256xf32> to vector<16x128xf32>
    %7 = arith.mulf %5, %5 : vector<16x128xf32>
    %8 = arith.mulf %6, %6 : vector<16x128xf32>
    %9 = arith.addf %7, %8 : vector<16x128xf32>
    %10 = arith.truncf %9 : vector<16x128xf32> to vector<16x128xbf16>
    %c0_4 = arith.constant 0 : index
    %c0_5 = arith.constant 0 : index
    %11 = vector.load %arg4[%c0_4, %c0_5] : memref<128x128xbf16, #tpu.memory_space<vmem>>, vector<128x128xbf16>
    %cst_6 = arith.constant dense<0.000000e+00> : vector<16x128xf32>
    %12 = tpu.matmul %10, %11, %cst_6 {dimension_numbers = #tpu.dot_dimension_numbers<[1], [0], [0], [1], [0, 0, 1, 1], [], []>} : vector<16x128xbf16>, vector<128x128xbf16>, vector<16x128xf32> -> vector<16x128xf32>
    %13 = arith.truncf %12 : vector<16x128xf32> to vector<16x128xbf16>
    %c0_7 = arith.constant 0 : index
    %c0_8 = arith.constant 0 : index
    %14 = vector.load %arg5[%c0_7, %c0_8] : memref<16x384xbf16, #tpu.memory_space<vmem>>, vector<16x128xbf16>
    tpu.vector_store %arg5[%c0_7, %c0_8], %13 {strides = array<i32>} : memref<16x384xbf16, #tpu.memory_space<vmem>>, vector<16x128xbf16>,
    %c1 = arith.constant 1 : index
    %c0_9 = arith.constant 0 : index
    %c0_10 = arith.constant 0 : index
    %15 = vector.load %arg3[%c1, %c0_9, %c0_10] : memref<3x16x256xbf16, #tpu.memory_space<vmem>>, vector<1x16x256xbf16>
    %16 = vector.shape_cast %15 : vector<1x16x256xbf16> to vector<16x256xbf16>
    %cst_11 = arith.constant dense<0.000000e+00> : vector<16x256xf32>
    %17 = tpu.matmul %1, %16, %cst_11 {dimension_numbers = #tpu.dot_dimension_numbers<[1], [0], [0], [1], [0, 0, 1, 1], [], []>} : vector<16x16xbf16>, vector<16x256xbf16>, vector<16x256xf32> -> vector<16x256xf32>
    %18 = vector.extract_strided_slice %17 {offsets = [0, 0], sizes = [16, 128], strides = [1, 1]} : vector<16x256xf32> to vector<16x128xf32>
    %19 = vector.extract_strided_slice %17 {offsets = [0, 128], sizes = [16, 128], strides = [1, 1]} : vector<16x256xf32> to vector<16x128xf32>
    %20 = arith.mulf %18, %18 : vector<16x128xf32>
    %21 = arith.mulf %19, %19 : vector<16x128xf32>
    %22 = arith.addf %20, %21 : vector<16x128xf32>
    %23 = arith.truncf %22 : vector<16x128xf32> to vector<16x128xbf16>
    %c0_12 = arith.constant 0 : index
    %c0_13 = arith.constant 0 : index
    %24 = vector.load %arg4[%c0_12, %c0_13] : memref<128x128xbf16, #tpu.memory_space<vmem>>, vector<128x128xbf16>
    %cst_14 = arith.constant dense<0.000000e+00> : vector<16x128xf32>
    %25 = tpu.matmul %23, %24, %cst_14 {dimension_numbers = #tpu.dot_dimension_numbers<[1], [0], [0], [1], [0, 0, 1, 1], [], []>} : vector<16x128xbf16>, vector<128x128xbf16>, vector<16x128xf32> -> vector<16x128xf32>
    %26 = arith.truncf %25 : vector<16x128xf32> to vector<16x128xbf16>
    %c0_15 = arith.constant 0 : index
    %c128 = arith.constant 128 : index
    %27 = vector.load %arg5[%c0_15, %c128] : memref<16x384xbf16, #tpu.memory_space<vmem>>, vector<16x128xbf16>
    tpu.vector_store %arg5[%c0_15, %c128], %26 {strides = array<i32>} : memref<16x384xbf16, #tpu.memory_space<vmem>>, vector<16x128xbf16>,
    %c2 = arith.constant 2 : index
    %c0_16 = arith.constant 0 : index
    %c0_17 = arith.constant 0 : index
    %28 = vector.load %arg3[%c2, %c0_16, %c0_17] : memref<3x16x256xbf16, #tpu.memory_space<vmem>>, vector<1x16x256xbf16>
    %29 = vector.shape_cast %28 : vector<1x16x256xbf16> to vector<16x256xbf16>
    %cst_18 = arith.constant dense<0.000000e+00> : vector<16x256xf32>
    %30 = tpu.matmul %1, %29, %cst_18 {dimension_numbers = #tpu.dot_dimension_numbers<[1], [0], [0], [1], [0, 0, 1, 1], [], []>} : vector<16x16xbf16>, vector<16x256xbf16>, vector<16x256xf32> -> vector<16x256xf32>
    %31 = vector.extract_strided_slice %30 {offsets = [0, 0], sizes = [16, 128], strides = [1, 1]} : vector<16x256xf32> to vector<16x128xf32>
    %32 = vector.extract_strided_slice %30 {offsets = [0, 128], sizes = [16, 128], strides = [1, 1]} : vector<16x256xf32> to vector<16x128xf32>
    %33 = arith.mulf %31, %31 : vector<16x128xf32>
    %34 = arith.mulf %32, %32 : vector<16x128xf32>
    %35 = arith.addf %33, %34 : vector<16x128xf32>
    %36 = arith.truncf %35 : vector<16x128xf32> to vector<16x128xbf16>
    %c0_19 = arith.constant 0 : index
    %c0_20 = arith.constant 0 : index
    %37 = vector.load %arg4[%c0_19, %c0_20] : memref<128x128xbf16, #tpu.memory_space<vmem>>, vector<128x128xbf16>
    %cst_21 = arith.constant dense<0.000000e+00> : vector<16x128xf32>
    %38 = tpu.matmul %36, %37, %cst_21 {dimension_numbers = #tpu.dot_dimension_numbers<[1], [0], [0], [1], [0, 0, 1, 1], [], []>} : vector<16x128xbf16>, vector<128x128xbf16>, vector<16x128xf32> -> vector<16x128xf32>
    %39 = arith.truncf %38 : vector<16x128xf32> to vector<16x128xbf16>
    %c0_22 = arith.constant 0 : index
    %c256 = arith.constant 256 : index
    %40 = vector.load %arg5[%c0_22, %c256] : memref<16x384xbf16, #tpu.memory_space<vmem>>, vector<16x128xbf16>
    tpu.vector_store %arg5[%c0_22, %c256], %39 {strides = array<i32>} : memref<16x384xbf16, #tpu.memory_space<vmem>>, vector<16x128xbf16>,
    return
  }
  func.func @transform_0(%arg0: i32, %arg1: i32) -> (i32, i32) {
    %c0_i32 = arith.constant 0 : i32
    %c0_i32_0 = arith.constant 0 : i32
    return %arg1, %c0_i32 : i32, i32
  }
  func.func @transform_1(%arg0: i32, %arg1: i32) -> (i32, i32, i32) {
    %c0_i32 = arith.constant 0 : i32
    %c0_i32_0 = arith.constant 0 : i32
    %c0_i32_1 = arith.constant 0 : i32
    return %arg0, %c0_i32, %c0_i32_0 : i32, i32, i32
  }
  func.func @transform_2(%arg0: i32, %arg1: i32) -> (i32, i32) {
    %c0_i32 = arith.constant 0 : i32
    %c0_i32_0 = arith.constant 0 : i32
    %c0_i32_1 = arith.constant 0 : i32
    return %c0_i32, %c0_i32_0 : i32, i32
  }
  func.func @transform_3(%arg0: i32, %arg1: i32) -> (i32, i32) {
    %c0_i32 = arith.constant 0 : i32
    return %arg1, %arg0 : i32, i32
  }
}

</mosaic_0001>

<llo_original>
// kernel: tpu_custom_call.1
$region0: #{tpu_custom_call.1}
  #allocation0 [shape = 'u32[]', space=smem, size = 0x4, offset = 0x4, fixed_abs, tag = 'smem constant byte address 0x4 - core index']
  #allocation1 [shape = 'u32[144,128]{1,0:T(1,128)}', space=vmem, size = 0x12000, scoped, tag = 'internal scratch']
  %s0 = inlined_call_operand.hbm [shape: f32[16,16], index: 0, kind: input, shape index: {}]
  %s1 = inlined_call_operand.hbm [shape: bf16[3,16,256], index: 1, kind: input, shape index: {}]
  %s2 = inlined_call_operand.hbm [shape: bf16[128,128], index: 2, kind: input, shape index: {}]
  %s3 = inlined_call_operand.hbm [shape: bf16[16,384], index: 3, kind: output, shape index: {}]
  %s4 = sld [smem:[#allocation0]]
  $region34: #{tpu_custom_call.1} parent=0
    _
  %s6 = ssub.s32 1, %s4
  %s7 = scalar_select 0, %s6, %s4
  $region1: #{tpu_custom_call.1} parent=0
    #allocation2 [shape = 'u8[8192]{0}', space=vmem, size = 0x2000, scoped, tag = 'input window, operand 0, single buffered']
    #allocation3 [shape = 's32[1]{0}', space=sflag, size = 0x4, scoped, tag = 'scoped memory for tpu_custom_call.1']
    #allocation4 [shape = 's32[1]{0}', space=sflag, size = 0x4, scoped, tag = 'scoped memory for tpu_custom_call.1']
    #allocation5 [shape = 'u8[24576]{0}', space=vmem, size = 0x6000, scoped, tag = 'input window, operand 1, single buffered']
    #allocation6 [shape = 's32[1]{0}', space=sflag, size = 0x4, scoped, tag = 'scoped memory for tpu_custom_call.1']
    #allocation7 [shape = 'u8[32768]{0}', space=vmem, size = 0x8000, scoped, tag = 'input window, operand 2, single buffered']
    #allocation8 [shape = 'u8[12288]{0}', space=vmem, size = 0x3000, scoped, tag = 'output window, operand 0, single buffered']
    %8 = vsyncpa [#allocation3], 0
    %9 = vsyncpa [#allocation6], 0
    %10 = vsyncpa [#allocation4], 0
    // Predicated region
    $region2: #{tpu_custom_call.1} parent=1 // pred_check
      _
    $region3: #{tpu_custom_call.1} parent=1 // pred_check_branch
      %12 = sbr.rel (0) target = $region5
    $region4: #{tpu_custom_call.1} parent=1 // pred_region
      %s14 = ssub.s32 256, 256
      %15 = vsyncadd [#allocation3], %s14
      %s16 = sshll.u32 [#allocation2], 4
      %s17 = int_to_ptr.vmem [resolvable:$true] %s16
      %22 = dma.hbm_to_vmem [thread:$0]  %s0, 256, %s17, [#allocation3], 128, 128, 8
    $region5: #{tpu_custom_call.1} parent=1 // pred_fallthru
      _
    // Predicated region
    $region6: #{tpu_custom_call.1} parent=1 // pred_check
      _
    $region7: #{tpu_custom_call.1} parent=1 // pred_check_branch
      %24 = sbr.rel (0) target = $region9
    $region8: #{tpu_custom_call.1} parent=1 // pred_region
      %s26 = ssub.s32 768, 768
      %27 = vsyncadd [#allocation6], %s26
      %s28 = sshll.u32 [#allocation5], 4
      %s29 = int_to_ptr.vmem [resolvable:$true] %s28
      %34 = dma.hbm_to_vmem [thread:$0]  %s1, 768, %s29, [#allocation6], 128, 128, 8
    $region9: #{tpu_custom_call.1} parent=1 // pred_fallthru
      _
    // Predicated region
    $region10: #{tpu_custom_call.1} parent=1 // pred_check
      _
    $region11: #{tpu_custom_call.1} parent=1 // pred_check_branch
      %36 = sbr.rel (0) target = $region13
    $region12: #{tpu_custom_call.1} parent=1 // pred_region
      %s38 = ssub.s32 1024, 1024
      %39 = vsyncadd [#allocation6], %s38
      %s40 = sshll.u32 [#allocation7], 4
      %s41 = int_to_ptr.vmem [resolvable:$true] %s40
      %46 = dma.hbm_to_vmem [thread:$0]  %s2, 1024, %s41, [#allocation6], 64, 64, 4
    $region13: #{tpu_custom_call.1} parent=1 // pred_fallthru
      _
    // Predicated region
    $region14: #{tpu_custom_call.1} parent=1 // pred_check
      _
    $region15: #{tpu_custom_call.1} parent=1 // pred_check_branch
      %48 = sbr.rel (0) target = $region17
    $region16: #{tpu_custom_call.1} parent=1 // pred_region
      %49 = dma.done [#allocation3], 256
    $region17: #{tpu_custom_call.1} parent=1 // pred_fallthru
      _
    // Predicated region
    $region18: #{tpu_custom_call.1} parent=1 // pred_check
      _
    $region19: #{tpu_custom_call.1} parent=1 // pred_check_branch
      %51 = sbr.rel (0) target = $region21
    $region20: #{tpu_custom_call.1} parent=1 // pred_region
      %52 = dma.done [#allocation6], 768
    $region21: #{tpu_custom_call.1} parent=1 // pred_fallthru
      _
    // Predicated region
    $region22: #{tpu_custom_call.1} parent=1 // pred_check
      _
    $region23: #{tpu_custom_call.1} parent=1 // pred_check_branch
      %54 = sbr.rel (0) target = $region25
    $region24: #{tpu_custom_call.1} parent=1 // pred_region
      %55 = dma.done [#allocation6], 1024
    $region25: #{tpu_custom_call.1} parent=1 // pred_fallthru
      _
    %v57 = vld [vmem:[#allocation2] sm:$0xff]
    %v58 = vld [vmem:[#allocation2 + $0x8] sm:$0xff]
    %v59 = vpack.c.bf16 %v58, %v57
    %v60 = vld [vmem:[#allocation5] sm:$0xff]
    %v61 = vld [vmem:[#allocation5 + $0x8] sm:$0xff]
    %v64 = vunpack.c.l.b16 %v60
    %v65 = vunpack.c.h.b16 %v60
    %v66 = vunpack.c.l.b16 %v61
    %v67 = vunpack.c.h.b16 %v61
    %v68 = vpack.c.b16 %v66, %v64
    %v69 = vpack.c.b16 %v67, %v65
    %vm72 = vcmask 130048
    %v74 = vsel %vm72, %v59, 0
    %76 = vmatprep.subr.bf16.mxu0 0
    %77 = vmatpush1.bf16.msra.mxu0 0
    %78 = vmatprep.subr.bf16.mxu0 0
    %79 = vmatpush1.bf16.msra.mxu0 0
    %80 = vmatprep.subr.bf16.mxu0 0
    %81 = vmatpush1.bf16.msra.mxu0 0
    %82 = vmatprep.subr.bf16.mxu0 0
    %83 = vmatpush1.bf16.msra.mxu0 0
    %84 = vmatprep.subr.bf16.mxu0 0
    %85 = vmatpush1.bf16.msra.mxu0 0
    %86 = vmatprep.subr.bf16.mxu0 0
    %87 = vmatpush1.bf16.msra.mxu0 0
    %88 = vmatprep.subr.bf16.mxu0 0
    %89 = vmatpush1.bf16.msra.mxu0 0
    %90 = vmatprep.subr.bf16.mxu0 %v69
    %91 = vmatpush1.bf16.msra.mxu0 %v68
    %92 = vmatprep.subr.bf16.mxu0 0
    %93 = vmatpush2.bf16.msra.mxu0 0
    %94 = vmatprep.subr.bf16.mxu0 0
    %95 = vmatpush2.bf16.msra.mxu0 0
    %96 = vmatprep.subr.bf16.mxu0 0
    %97 = vmatpush2.bf16.msra.mxu0 0
    %98 = vmatprep.subr.bf16.mxu0 0
    %99 = vmatpush2.bf16.msra.mxu0 0
    %100 = vmatprep.subr.bf16.mxu0 0
    %101 = vmatpush2.bf16.msra.mxu0 0
    %102 = vmatprep.subr.bf16.mxu0 0
    %103 = vmatpush2.bf16.msra.mxu0 0
    %104 = vmatprep.subr.bf16.mxu0 0
    %105 = vmatpush2.bf16.msra.mxu0 0
    %106 = vmatprep.subr.bf16.mxu0 0
    %107 = vmatpush2.bf16.msra.mxu0 0
    %108 = vmatprep.mubr.bf16.mxu0 0
    %109 = vmatmul.mubr.bf16.gmra.mxu0 %v74
    %v110 = vpop.f32.mrf.mxu0
    %v111 = vadd.f32 0.0, %v110
    %v112 = vpop.f32.mrf.mxu0
    %v113 = vadd.f32 0.0, %v112
    %v114 = vpop.f32.mrf.mxu0
    %v115 = vadd.f32 0.0, %v114
    %v116 = vpop.f32.mrf.mxu0
    %v117 = vadd.f32 0.0, %v116
    %118 = vdwg.mxu0
    %v119 = vmul.f32 %v111, %v111
    %v120 = vmul.f32 %v115, %v115
    %v121 = vmul.f32 %v113, %v113
    %v122 = vmul.f32 %v117, %v117
    %v123 = vadd.f32 %v119, %v121
    %v124 = vadd.f32 %v120, %v122
    %v125 = vpack.c.bf16 %v124, %v123
    %v126 = vld [vmem:[#allocation7] sm:$0xf]
    %v127 = vld [vmem:[#allocation7 + $0x4] sm:$0xf]
    %v128 = vld [vmem:[#allocation7 + $0x8] sm:$0xf]
    %v129 = vld [vmem:[#allocation7 + $0xc] sm:$0xf]
    %v130 = vld [vmem:[#allocation7 + $0x10] sm:$0xf]
    %v131 = vld [vmem:[#allocation7 + $0x14] sm:$0xf]
    %v132 = vld [vmem:[#allocation7 + $0x18] sm:$0xf]
    %v133 = vld [vmem:[#allocation7 + $0x1c] sm:$0xf]
    %v134 = vld [vmem:[#allocation7 + $0x20] sm:$0xf]
    %v135 = vld [vmem:[#allocation7 + $0x24] sm:$0xf]
    %v136 = vld [vmem:[#allocation7 + $0x28] sm:$0xf]
    %v137 = vld [vmem:[#allocation7 + $0x2c] sm:$0xf]
    %v138 = vld [vmem:[#allocation7 + $0x30] sm:$0xf]
    %v139 = vld [vmem:[#allocation7 + $0x34] sm:$0xf]
    %v140 = vld [vmem:[#allocation7 + $0x38] sm:$0xf]
    %v141 = vld [vmem:[#allocation7 + $0x3c] sm:$0xf]
    %v158 = vunpack.c.l.b16 %v126
    %v159 = vunpack.c.l.b16 %v127
    %v160 = vunpack.c.l.b16 %v128
    %v161 = vunpack.c.l.b16 %v129
    %v162 = vunpack.c.l.b16 %v130
    %v163 = vunpack.c.l.b16 %v131
    %v164 = vunpack.c.l.b16 %v132
    %v165 = vunpack.c.l.b16 %v133
    %v166 = vunpack.c.l.b16 %v134
    %v167 = vunpack.c.l.b16 %v135
    %v168 = vunpack.c.l.b16 %v136
    %v169 = vunpack.c.l.b16 %v137
    %v170 = vunpack.c.l.b16 %v138
    %v171 = vunpack.c.l.b16 %v139
    %v172 = vunpack.c.l.b16 %v140
    %v173 = vunpack.c.l.b16 %v141
    %v174 = vpack.c.b16 %v159, %v158
    %v175 = vpack.c.b16 %v161, %v160
    %v176 = vpack.c.b16 %v163, %v162
    %v177 = vpack.c.b16 %v165, %v164
    %v178 = vpack.c.b16 %v167, %v166
    %v179 = vpack.c.b16 %v169, %v168
    %v180 = vpack.c.b16 %v171, %v170
    %v181 = vpack.c.b16 %v173, %v172
    %190 = vmatprep.subr.bf16.mxu0 0
    %191 = vmatpush1.bf16.msra.mxu0 %v181
    %192 = vmatprep.subr.bf16.mxu0 0
    %193 = vmatpush1.bf16.msra.mxu0 %v180
    %194 = vmatprep.subr.bf16.mxu0 0
    %195 = vmatpush1.bf16.msra.mxu0 %v179
    %196 = vmatprep.subr.bf16.mxu0 0
    %197 = vmatpush1.bf16.msra.mxu0 %v178
    %198 = vmatprep.subr.bf16.mxu0 0
    %199 = vmatpush1.bf16.msra.mxu0 %v177
    %200 = vmatprep.subr.bf16.mxu0 0
    %201 = vmatpush1.bf16.msra.mxu0 %v176
    %202 = vmatprep.subr.bf16.mxu0 0
    %203 = vmatpush1.bf16.msra.mxu0 %v175
    %204 = vmatprep.subr.bf16.mxu0 0
    %205 = vmatpush1.bf16.msra.mxu0 %v174
    %206 = vmatprep.subr.bf16.mxu0 0
    %207 = vmatpush2.bf16.msra.mxu0 0
    %208 = vmatprep.subr.bf16.mxu0 0
    %209 = vmatpush2.bf16.msra.mxu0 0
    %210 = vmatprep.subr.bf16.mxu0 0
    %211 = vmatpush2.bf16.msra.mxu0 0
    %212 = vmatprep.subr.bf16.mxu0 0
    %213 = vmatpush2.bf16.msra.mxu0 0
    %214 = vmatprep.subr.bf16.mxu0 0
    %215 = vmatpush2.bf16.msra.mxu0 0
    %216 = vmatprep.subr.bf16.mxu0 0
    %217 = vmatpush2.bf16.msra.mxu0 0
    %218 = vmatprep.subr.bf16.mxu0 0
    %219 = vmatpush2.bf16.msra.mxu0 0
    %220 = vmatprep.subr.bf16.mxu0 0
    %221 = vmatpush2.bf16.msra.mxu0 0
    %222 = vmatprep.mubr.bf16.mxu0 0
    %223 = vmatmul.mubr.bf16.gmra.mxu0 %v125
    %v224 = vpop.f32.mrf.mxu0
    %v225 = vadd.f32 0.0, %v224
    %v226 = vpop.f32.mrf.mxu0
    %v227 = vpop.f32.mrf.mxu0
    %v228 = vadd.f32 0.0, %v227
    %v229 = vpop.f32.mrf.mxu0
    %230 = vdwg.mxu0
    %v231 = vpack.c.bf16 %v228, %v225
    %v233 = vunpack.c.l.b16 %v231
    %v234 = vunpack.c.h.b16 %v231
    %v235 = vpack.c.b16 %v233, %v233
    %v236 = vpack.c.b16 %v234, %v234
    %239 = vst [vmem:[#allocation8] sm:$0xf] %v235
    %240 = vst [vmem:[#allocation8 + $0xc] sm:$0xf] %v236
    %s241 = scalar_lea.vmem [#allocation5], 16
    %v242 = vld [vmem:[%s241] sm:$0xff]
    %v243 = vld [vmem:[%s241 + $0x8] sm:$0xff]
    %v246 = vunpack.c.l.b16 %v242
    %v247 = vunpack.c.h.b16 %v242
    %v248 = vunpack.c.l.b16 %v243
    %v249 = vunpack.c.h.b16 %v243
    %v250 = vpack.c.b16 %v248, %v246
    %v251 = vpack.c.b16 %v249, %v247
    %254 = vmatprep.subr.bf16.mxu0 0
    %255 = vmatpush1.bf16.msra.mxu0 0
    %256 = vmatprep.subr.bf16.mxu0 0
    %257 = vmatpush1.bf16.msra.mxu0 0
    %258 = vmatprep.subr.bf16.mxu0 0
    %259 = vmatpush1.bf16.msra.mxu0 0
    %260 = vmatprep.subr.bf16.mxu0 0
    %261 = vmatpush1.bf16.msra.mxu0 0
    %262 = vmatprep.subr.bf16.mxu0 0
    %263 = vmatpush1.bf16.msra.mxu0 0
    %264 = vmatprep.subr.bf16.mxu0 0
    %265 = vmatpush1.bf16.msra.mxu0 0
    %266 = vmatprep.subr.bf16.mxu0 0
    %267 = vmatpush1.bf16.msra.mxu0 0
    %268 = vmatprep.subr.bf16.mxu0 %v251
    %269 = vmatpush1.bf16.msra.mxu0 %v250
    %270 = vmatprep.subr.bf16.mxu0 0
    %271 = vmatpush2.bf16.msra.mxu0 0
    %272 = vmatprep.subr.bf16.mxu0 0
    %273 = vmatpush2.bf16.msra.mxu0 0
    %274 = vmatprep.subr.bf16.mxu0 0
    %275 = vmatpush2.bf16.msra.mxu0 0
    %276 = vmatprep.subr.bf16.mxu0 0
    %277 = vmatpush2.bf16.msra.mxu0 0
    %278 = vmatprep.subr.bf16.mxu0 0
    %279 = vmatpush2.bf16.msra.mxu0 0
    %280 = vmatprep.subr.bf16.mxu0 0
    %281 = vmatpush2.bf16.msra.mxu0 0
    %282 = vmatprep.subr.bf16.mxu0 0
    %283 = vmatpush2.bf16.msra.mxu0 0
    %284 = vmatprep.subr.bf16.mxu0 0
    %285 = vmatpush2.bf16.msra.mxu0 0
    %286 = vmatprep.mubr.bf16.mxu0 0
    %287 = vmatmul.mubr.bf16.gmra.mxu0 %v74
    %v288 = vpop.f32.mrf.mxu0
    %v289 = vadd.f32 0.0, %v288
    %v290 = vpop.f32.mrf.mxu0
    %v291 = vadd.f32 0.0, %v290
    %v292 = vpop.f32.mrf.mxu0
    %v293 = vadd.f32 0.0, %v292
    %v294 = vpop.f32.mrf.mxu0
    %v295 = vadd.f32 0.0, %v294
    %296 = vdwg.mxu0
    %v297 = vmul.f32 %v289, %v289
    %v298 = vmul.f32 %v293, %v293
    %v299 = vmul.f32 %v291, %v291
    %v300 = vmul.f32 %v295, %v295
    %v301 = vadd.f32 %v297, %v299
    %v302 = vadd.f32 %v298, %v300
    %v303 = vpack.c.bf16 %v302, %v301
    %v304 = vld [vmem:[#allocation7] sm:$0xf]
    %v305 = vld [vmem:[#allocation7 + $0x4] sm:$0xf]
    %v306 = vld [vmem:[#allocation7 + $0x8] sm:$0xf]
    %v307 = vld [vmem:[#allocation7 + $0xc] sm:$0xf]
    %v308 = vld [vmem:[#allocation7 + $0x10] sm:$0xf]
    %v309 = vld [vmem:[#allocation7 + $0x14] sm:$0xf]
    %v310 = vld [vmem:[#allocation7 + $0x18] sm:$0xf]
    %v311 = vld [vmem:[#allocation7 + $0x1c] sm:$0xf]
    %v312 = vld [vmem:[#allocation7 + $0x20] sm:$0xf]
    %v313 = vld [vmem:[#allocation7 + $0x24] sm:$0xf]
    %v314 = vld [vmem:[#allocation7 + $0x28] sm:$0xf]
    %v315 = vld [vmem:[#allocation7 + $0x2c] sm:$0xf]
    %v316 = vld [vmem:[#allocation7 + $0x30] sm:$0xf]
    %v317 = vld [vmem:[#allocation7 + $0x34] sm:$0xf]
    %v318 = vld [vmem:[#allocation7 + $0x38] sm:$0xf]
    %v319 = vld [vmem:[#allocation7 + $0x3c] sm:$0xf]
    %v336 = vunpack.c.l.b16 %v304
    %v337 = vunpack.c.l.b16 %v305
    %v338 = vunpack.c.l.b16 %v306
    %v339 = vunpack.c.l.b16 %v307
    %v340 = vunpack.c.l.b16 %v308
    %v341 = vunpack.c.l.b16 %v309
    %v342 = vunpack.c.l.b16 %v310
    %v343 = vunpack.c.l.b16 %v311
    %v344 = vunpack.c.l.b16 %v312
    %v345 = vunpack.c.l.b16 %v313
    %v346 = vunpack.c.l.b16 %v314
    %v347 = vunpack.c.l.b16 %v315
    %v348 = vunpack.c.l.b16 %v316
    %v349 = vunpack.c.l.b16 %v317
    %v350 = vunpack.c.l.b16 %v318
    %v351 = vunpack.c.l.b16 %v319
    %v352 = vpack.c.b16 %v337, %v336
    %v353 = vpack.c.b16 %v339, %v338
    %v354 = vpack.c.b16 %v341, %v340
    %v355 = vpack.c.b16 %v343, %v342
    %v356 = vpack.c.b16 %v345, %v344
    %v357 = vpack.c.b16 %v347, %v346
    %v358 = vpack.c.b16 %v349, %v348
    %v359 = vpack.c.b16 %v351, %v350
    %368 = vmatprep.subr.bf16.mxu0 0
    %369 = vmatpush1.bf16.msra.mxu0 %v359
    %370 = vmatprep.subr.bf16.mxu0 0
    %371 = vmatpush1.bf16.msra.mxu0 %v358
    %372 = vmatprep.subr.bf16.mxu0 0
    %373 = vmatpush1.bf16.msra.mxu0 %v357
    %374 = vmatprep.subr.bf16.mxu0 0
    %375 = vmatpush1.bf16.msra.mxu0 %v356
    %376 = vmatprep.subr.bf16.mxu0 0
    %377 = vmatpush1.bf16.msra.mxu0 %v355
    %378 = vmatprep.subr.bf16.mxu0 0
    %379 = vmatpush1.bf16.msra.mxu0 %v354
    %380 = vmatprep.subr.bf16.mxu0 0
    %381 = vmatpush1.bf16.msra.mxu0 %v353
    %382 = vmatprep.subr.bf16.mxu0 0
    %383 = vmatpush1.bf16.msra.mxu0 %v352
    %384 = vmatprep.subr.bf16.mxu0 0
    %385 = vmatpush2.bf16.msra.mxu0 0
    %386 = vmatprep.subr.bf16.mxu0 0
    %387 = vmatpush2.bf16.msra.mxu0 0
    %388 = vmatprep.subr.bf16.mxu0 0
    %389 = vmatpush2.bf16.msra.mxu0 0
    %390 = vmatprep.subr.bf16.mxu0 0
    %391 = vmatpush2.bf16.msra.mxu0 0
    %392 = vmatprep.subr.bf16.mxu0 0
    %393 = vmatpush2.bf16.msra.mxu0 0
    %394 = vmatprep.subr.bf16.mxu0 0
    %395 = vmatpush2.bf16.msra.mxu0 0
    %396 = vmatprep.subr.bf16.mxu0 0
    %397 = vmatpush2.bf16.msra.mxu0 0
    %398 = vmatprep.subr.bf16.mxu0 0
    %399 = vmatpush2.bf16.msra.mxu0 0
    %400 = vmatprep.mubr.bf16.mxu0 0
    %401 = vmatmul.mubr.bf16.gmra.mxu0 %v303
    %v402 = vpop.f32.mrf.mxu0
    %v403 = vadd.f32 0.0, %v402
    %v404 = vpop.f32.mrf.mxu0
    %v405 = vpop.f32.mrf.mxu0
    %v406 = vadd.f32 0.0, %v405
    %v407 = vpop.f32.mrf.mxu0
    %408 = vdwg.mxu0
    %v409 = vpack.c.bf16 %v406, %v403
    %v411 = vunpack.c.l.b16 %v409
    %v412 = vunpack.c.h.b16 %v409
    %v413 = vpack.c.b16 %v411, %v411
    %v414 = vpack.c.b16 %v412, %v412
    %417 = vst [vmem:[#allocation8 + $0x4] sm:$0xf] %v413
    %418 = vst [vmem:[#allocation8 + $0x10] sm:$0xf] %v414
    %s419 = scalar_lea.vmem [#allocation5], 32
    %v420 = vld [vmem:[%s419] sm:$0xff]
    %v421 = vld [vmem:[%s419 + $0x8] sm:$0xff]
    %v424 = vunpack.c.l.b16 %v420
    %v425 = vunpack.c.h.b16 %v420
    %v426 = vunpack.c.l.b16 %v421
    %v427 = vunpack.c.h.b16 %v421
    %v428 = vpack.c.b16 %v426, %v424
    %v429 = vpack.c.b16 %v427, %v425
    %432 = vmatprep.subr.bf16.mxu0 0
    %433 = vmatpush1.bf16.msra.mxu0 0
    %434 = vmatprep.subr.bf16.mxu0 0
    %435 = vmatpush1.bf16.msra.mxu0 0
    %436 = vmatprep.subr.bf16.mxu0 0
    %437 = vmatpush1.bf16.msra.mxu0 0
    %438 = vmatprep.subr.bf16.mxu0 0
    %439 = vmatpush1.bf16.msra.mxu0 0
    %440 = vmatprep.subr.bf16.mxu0 0
    %441 = vmatpush1.bf16.msra.mxu0 0
    %442 = vmatprep.subr.bf16.mxu0 0
    %443 = vmatpush1.bf16.msra.mxu0 0
    %444 = vmatprep.subr.bf16.mxu0 0
    %445 = vmatpush1.bf16.msra.mxu0 0
    %446 = vmatprep.subr.bf16.mxu0 %v429
    %447 = vmatpush1.bf16.msra.mxu0 %v428
    %448 = vmatprep.subr.bf16.mxu0 0
    %449 = vmatpush2.bf16.msra.mxu0 0
    %450 = vmatprep.subr.bf16.mxu0 0
    %451 = vmatpush2.bf16.msra.mxu0 0
    %452 = vmatprep.subr.bf16.mxu0 0
    %453 = vmatpush2.bf16.msra.mxu0 0
    %454 = vmatprep.subr.bf16.mxu0 0
    %455 = vmatpush2.bf16.msra.mxu0 0
    %456 = vmatprep.subr.bf16.mxu0 0
    %457 = vmatpush2.bf16.msra.mxu0 0
    %458 = vmatprep.subr.bf16.mxu0 0
    %459 = vmatpush2.bf16.msra.mxu0 0
    %460 = vmatprep.subr.bf16.mxu0 0
    %461 = vmatpush2.bf16.msra.mxu0 0
    %462 = vmatprep.subr.bf16.mxu0 0
    %463 = vmatpush2.bf16.msra.mxu0 0
    %464 = vmatprep.mubr.bf16.mxu0 0
    %465 = vmatmul.mubr.bf16.gmra.mxu0 %v74
    %v466 = vpop.f32.mrf.mxu0
    %v467 = vadd.f32 0.0, %v466
    %v468 = vpop.f32.mrf.mxu0
    %v469 = vadd.f32 0.0, %v468
    %v470 = vpop.f32.mrf.mxu0
    %v471 = vadd.f32 0.0, %v470
    %v472 = vpop.f32.mrf.mxu0
    %v473 = vadd.f32 0.0, %v472
    %474 = vdwg.mxu0
    %v475 = vmul.f32 %v467, %v467
    %v476 = vmul.f32 %v471, %v471
    %v477 = vmul.f32 %v469, %v469
    %v478 = vmul.f32 %v473, %v473
    %v479 = vadd.f32 %v475, %v477
    %v480 = vadd.f32 %v476, %v478
    %v481 = vpack.c.bf16 %v480, %v479
    %v482 = vld [vmem:[#allocation7] sm:$0xf]
    %v483 = vld [vmem:[#allocation7 + $0x4] sm:$0xf]
    %v484 = vld [vmem:[#allocation7 + $0x8] sm:$0xf]
    %v485 = vld [vmem:[#allocation7 + $0xc] sm:$0xf]
    %v486 = vld [vmem:[#allocation7 + $0x10] sm:$0xf]
    %v487 = vld [vmem:[#allocation7 + $0x14] sm:$0xf]
    %v488 = vld [vmem:[#allocation7 + $0x18] sm:$0xf]
    %v489 = vld [vmem:[#allocation7 + $0x1c] sm:$0xf]
    %v490 = vld [vmem:[#allocation7 + $0x20] sm:$0xf]
    %v491 = vld [vmem:[#allocation7 + $0x24] sm:$0xf]
    %v492 = vld [vmem:[#allocation7 + $0x28] sm:$0xf]
    %v493 = vld [vmem:[#allocation7 + $0x2c] sm:$0xf]
    %v494 = vld [vmem:[#allocation7 + $0x30] sm:$0xf]
    %v495 = vld [vmem:[#allocation7 + $0x34] sm:$0xf]
    %v496 = vld [vmem:[#allocation7 + $0x38] sm:$0xf]
    %v497 = vld [vmem:[#allocation7 + $0x3c] sm:$0xf]
    %v514 = vunpack.c.l.b16 %v482
    %v515 = vunpack.c.l.b16 %v483
    %v516 = vunpack.c.l.b16 %v484
    %v517 = vunpack.c.l.b16 %v485
    %v518 = vunpack.c.l.b16 %v486
    %v519 = vunpack.c.l.b16 %v487
    %v520 = vunpack.c.l.b16 %v488
    %v521 = vunpack.c.l.b16 %v489
    %v522 = vunpack.c.l.b16 %v490
    %v523 = vunpack.c.l.b16 %v491
    %v524 = vunpack.c.l.b16 %v492
    %v525 = vunpack.c.l.b16 %v493
    %v526 = vunpack.c.l.b16 %v494
    %v527 = vunpack.c.l.b16 %v495
    %v528 = vunpack.c.l.b16 %v496
    %v529 = vunpack.c.l.b16 %v497
    %v530 = vpack.c.b16 %v515, %v514
    %v531 = vpack.c.b16 %v517, %v516
    %v532 = vpack.c.b16 %v519, %v518
    %v533 = vpack.c.b16 %v521, %v520
    %v534 = vpack.c.b16 %v523, %v522
    %v535 = vpack.c.b16 %v525, %v524
    %v536 = vpack.c.b16 %v527, %v526
    %v537 = vpack.c.b16 %v529, %v528
    %546 = vmatprep.subr.bf16.mxu0 0
    %547 = vmatpush1.bf16.msra.mxu0 %v537
    %548 = vmatprep.subr.bf16.mxu0 0
    %549 = vmatpush1.bf16.msra.mxu0 %v536
    %550 = vmatprep.subr.bf16.mxu0 0
    %551 = vmatpush1.bf16.msra.mxu0 %v535
    %552 = vmatprep.subr.bf16.mxu0 0
    %553 = vmatpush1.bf16.msra.mxu0 %v534
    %554 = vmatprep.subr.bf16.mxu0 0
    %555 = vmatpush1.bf16.msra.mxu0 %v533
    %556 = vmatprep.subr.bf16.mxu0 0
    %557 = vmatpush1.bf16.msra.mxu0 %v532
    %558 = vmatprep.subr.bf16.mxu0 0
    %559 = vmatpush1.bf16.msra.mxu0 %v531
    %560 = vmatprep.subr.bf16.mxu0 0
    %561 = vmatpush1.bf16.msra.mxu0 %v530
    %562 = vmatprep.subr.bf16.mxu0 0
    %563 = vmatpush2.bf16.msra.mxu0 0
    %564 = vmatprep.subr.bf16.mxu0 0
    %565 = vmatpush2.bf16.msra.mxu0 0
    %566 = vmatprep.subr.bf16.mxu0 0
    %567 = vmatpush2.bf16.msra.mxu0 0
    %568 = vmatprep.subr.bf16.mxu0 0
    %569 = vmatpush2.bf16.msra.mxu0 0
    %570 = vmatprep.subr.bf16.mxu0 0
    %571 = vmatpush2.bf16.msra.mxu0 0
    %572 = vmatprep.subr.bf16.mxu0 0
    %573 = vmatpush2.bf16.msra.mxu0 0
    %574 = vmatprep.subr.bf16.mxu0 0
    %575 = vmatpush2.bf16.msra.mxu0 0
    %576 = vmatprep.subr.bf16.mxu0 0
    %577 = vmatpush2.bf16.msra.mxu0 0
    %578 = vmatprep.mubr.bf16.mxu0 0
    %579 = vmatmul.mubr.bf16.gmra.mxu0 %v481
    %v580 = vpop.f32.mrf.mxu0
    %v581 = vadd.f32 0.0, %v580
    %v582 = vpop.f32.mrf.mxu0
    %v583 = vpop.f32.mrf.mxu0
    %v584 = vadd.f32 0.0, %v583
    %v585 = vpop.f32.mrf.mxu0
    %586 = vdwg.mxu0
    %v587 = vpack.c.bf16 %v584, %v581
    %v589 = vunpack.c.l.b16 %v587
    %v590 = vunpack.c.h.b16 %v587
    %v591 = vpack.c.b16 %v589, %v589
    %v592 = vpack.c.b16 %v590, %v590
    %595 = vst [vmem:[#allocation8 + $0x8] sm:$0xf] %v591
    %596 = vst [vmem:[#allocation8 + $0x14] sm:$0xf] %v592
    // Predicated region
    $region26: #{tpu_custom_call.1} parent=1 // pred_check
      _
    $region27: #{tpu_custom_call.1} parent=1 // pred_check_branch
      %598 = sbr.rel (0) target = $region29
    $region28: #{tpu_custom_call.1} parent=1 // pred_region
      %s600 = ssub.s32 384, 384
      %601 = vsyncadd [#allocation4], %s600
      %s602 = sshll.u32 [#allocation8], 4
      %s603 = int_to_ptr.vmem [resolvable:$true] %s602
      %608 = dma.vmem_to_hbm [thread:$0]  %s603, 384, %s3, [#allocation4], 192, 192, 12
    $region29: #{tpu_custom_call.1} parent=1 // pred_fallthru
      _
    // Predicated region
    $region30: #{tpu_custom_call.1} parent=1 // pred_check
      _
    $region31: #{tpu_custom_call.1} parent=1 // pred_check_branch
      %610 = sbr.rel (0) target = $region33
    $region32: #{tpu_custom_call.1} parent=1 // pred_region
      %611 = dma.done [#allocation4], 384
    $region33: #{tpu_custom_call.1} parent=1 // pred_fallthru
      _
    %612 = vsyncpa [#allocation3], 1
    %613 = vsyncpa [#allocation6], 1
    %614 = vsyncpa [#allocation4], 1

// kernel: tpu_custom_call.1
$region0: #{tpu_custom_call.1}
  #allocation0 [shape = 'u32[]', space=smem, size = 0x4, offset = 0x4, fixed_abs, tag = 'smem constant byte address 0x4 - core index']
  #allocation1 [shape = 'u32[144,128]{1,0:T(1,128)}', space=vmem, size = 0x12000, scoped, tag = 'internal scratch']
  %s0 = inlined_call_operand.hbm [shape: f32[16,16], index: 0, kind: input, shape index: {}]
  %s1 = inlined_call_operand.hbm [shape: bf16[3,16,256], index: 1, kind: input, shape index: {}]
  %s2 = inlined_call_operand.hbm [shape: bf16[128,128], index: 2, kind: input, shape index: {}]
  %s3 = inlined_call_operand.hbm [shape: bf16[16,384], index: 3, kind: output, shape index: {}]
  %s4 = sld [smem:[#allocation0]]
  $region34: #{tpu_custom_call.1} parent=0
    _
  %s6 = ssub.s32 1, %s4
  %s7 = scalar_select 0, %s6, %s4
  $region1: #{tpu_custom_call.1} parent=0
    #allocation2 [shape = 'u8[8192]{0}', space=vmem, size = 0x2000, scoped, tag = 'input window, operand 0, single buffered']
    #allocation3 [shape = 's32[1]{0}', space=sflag, size = 0x4, scoped, tag = 'scoped memory for tpu_custom_call.1']
    #allocation4 [shape = 's32[1]{0}', space=sflag, size = 0x4, scoped, tag = 'scoped memory for tpu_custom_call.1']
    #allocation5 [shape = 'u8[24576]{0}', space=vmem, size = 0x6000, scoped, tag = 'input window, operand 1, single buffered']
    #allocation6 [shape = 's32[1]{0}', space=sflag, size = 0x4, scoped, tag = 'scoped memory for tpu_custom_call.1']
    #allocation7 [shape = 'u8[32768]{0}', space=vmem, size = 0x8000, scoped, tag = 'input window, operand 2, single buffered']
    #allocation8 [shape = 'u8[12288]{0}', space=vmem, size = 0x3000, scoped, tag = 'output window, operand 0, single buffered']
    %8 = vsyncpa [#allocation3], 0
    %9 = vsyncpa [#allocation6], 0
    %10 = vsyncpa [#allocation4], 0
    // Predicated region
    $region2: #{tpu_custom_call.1} parent=1 // pred_check
      _
    $region3: #{tpu_custom_call.1} parent=1 // pred_check_branch
      %12 = sbr.rel (0) target = $region5
    $region4: #{tpu_custom_call.1} parent=1 // pred_region
      %s14 = ssub.s32 256, 256
      %15 = vsyncadd [#allocation3], %s14
      %s16 = sshll.u32 [#allocation2], 4
      %s17 = int_to_ptr.vmem [resolvable:$true] %s16
      %22 = dma.hbm_to_vmem [thread:$0]  %s0, 256, %s17, [#allocation3], 128, 128, 8
    $region5: #{tpu_custom_call.1} parent=1 // pred_fallthru
      _
    // Predicated region
    $region6: #{tpu_custom_call.1} parent=1 // pred_check
      _
    $region7: #{tpu_custom_call.1} parent=1 // pred_check_branch
      %24 = sbr.rel (0) target = $region9
    $region8: #{tpu_custom_call.1} parent=1 // pred_region
      %s26 = ssub.s32 768, 768
      %27 = vsyncadd [#allocation6], %s26
      %s28 = sshll.u32 [#allocation5], 4
      %s29 = int_to_ptr.vmem [resolvable:$true] %s28
      %34 = dma.hbm_to_vmem [thread:$0]  %s1, 768, %s29, [#allocation6], 128, 128, 8
    $region9: #{tpu_custom_call.1} parent=1 // pred_fallthru
      _
    // Predicated region
    $region10: #{tpu_custom_call.1} parent=1 // pred_check
      _
    $region11: #{tpu_custom_call.1} parent=1 // pred_check_branch
      %36 = sbr.rel (0) target = $region13
    $region12: #{tpu_custom_call.1} parent=1 // pred_region
      %s38 = ssub.s32 1024, 1024
      %39 = vsyncadd [#allocation6], %s38
      %s40 = sshll.u32 [#allocation7], 4
      %s41 = int_to_ptr.vmem [resolvable:$true] %s40
      %46 = dma.hbm_to_vmem [thread:$0]  %s2, 1024, %s41, [#allocation6], 64, 64, 4
    $region13: #{tpu_custom_call.1} parent=1 // pred_fallthru
      _
    // Predicated region
    $region14: #{tpu_custom_call.1} parent=1 // pred_check
      _
    $region15: #{tpu_custom_call.1} parent=1 // pred_check_branch
      %48 = sbr.rel (0) target = $region17
    $region16: #{tpu_custom_call.1} parent=1 // pred_region
      %49 = dma.done [#allocation3], 256
    $region17: #{tpu_custom_call.1} parent=1 // pred_fallthru
      _
    // Predicated region
    $region18: #{tpu_custom_call.1} parent=1 // pred_check
      _
    $region19: #{tpu_custom_call.1} parent=1 // pred_check_branch
      %51 = sbr.rel (0) target = $region21
    $region20: #{tpu_custom_call.1} parent=1 // pred_region
      %52 = dma.done [#allocation6], 768
    $region21: #{tpu_custom_call.1} parent=1 // pred_fallthru
      _
    // Predicated region
    $region22: #{tpu_custom_call.1} parent=1 // pred_check
      _
    $region23: #{tpu_custom_call.1} parent=1 // pred_check_branch
      %54 = sbr.rel (0) target = $region25
    $region24: #{tpu_custom_call.1} parent=1 // pred_region
      %55 = dma.done [#allocation6], 1024
    $region25: #{tpu_custom_call.1} parent=1 // pred_fallthru
      _
    %v57 = vld [vmem:[#allocation2] sm:$0xff]
    %v58 = vld [vmem:[#allocation2 + $0x8] sm:$0xff]
    %v59 = vpack.c.bf16 %v58, %v57
    %v60 = vld [vmem:[#allocation5] sm:$0xff]
    %v61 = vld [vmem:[#allocation5 + $0x8] sm:$0xff]
    %v64 = vunpack.c.l.b16 %v60
    %v65 = vunpack.c.h.b16 %v60
    %v66 = vunpack.c.l.b16 %v61
    %v67 = vunpack.c.h.b16 %v61
    %v68 = vpack.c.b16 %v66, %v64
    %v69 = vpack.c.b16 %v67, %v65
    %vm72 = vcmask 130048
    %v74 = vsel %vm72, %v59, 0
    %76 = vmatprep.subr.bf16.mxu0 0
    %77 = vmatpush1.bf16.msra.mxu0 0
    %78 = vmatprep.subr.bf16.mxu0 0
    %79 = vmatpush1.bf16.msra.mxu0 0
    %80 = vmatprep.subr.bf16.mxu0 0
    %81 = vmatpush1.bf16.msra.mxu0 0
    %82 = vmatprep.subr.bf16.mxu0 0
    %83 = vmatpush1.bf16.msra.mxu0 0
    %84 = vmatprep.subr.bf16.mxu0 0
    %85 = vmatpush1.bf16.msra.mxu0 0
    %86 = vmatprep.subr.bf16.mxu0 0
    %87 = vmatpush1.bf16.msra.mxu0 0
    %88 = vmatprep.subr.bf16.mxu0 0
    %89 = vmatpush1.bf16.msra.mxu0 0
    %90 = vmatprep.subr.bf16.mxu0 %v69
    %91 = vmatpush1.bf16.msra.mxu0 %v68
    %92 = vmatprep.subr.bf16.mxu0 0
    %93 = vmatpush2.bf16.msra.mxu0 0
    %94 = vmatprep.subr.bf16.mxu0 0
    %95 = vmatpush2.bf16.msra.mxu0 0
    %96 = vmatprep.subr.bf16.mxu0 0
    %97 = vmatpush2.bf16.msra.mxu0 0
    %98 = vmatprep.subr.bf16.mxu0 0
    %99 = vmatpush2.bf16.msra.mxu0 0
    %100 = vmatprep.subr.bf16.mxu0 0
    %101 = vmatpush2.bf16.msra.mxu0 0
    %102 = vmatprep.subr.bf16.mxu0 0
    %103 = vmatpush2.bf16.msra.mxu0 0
    %104 = vmatprep.subr.bf16.mxu0 0
    %105 = vmatpush2.bf16.msra.mxu0 0
    %106 = vmatprep.subr.bf16.mxu0 0
    %107 = vmatpush2.bf16.msra.mxu0 0
    %108 = vmatprep.mubr.bf16.mxu0 0
    %109 = vmatmul.mubr.bf16.gmra.mxu0 %v74
    %v110 = vpop.f32.mrf.mxu0
    %v111 = vadd.f32 0.0, %v110
    %v112 = vpop.f32.mrf.mxu0
    %v113 = vadd.f32 0.0, %v112
    %v114 = vpop.f32.mrf.mxu0
    %v115 = vadd.f32 0.0, %v114
    %v116 = vpop.f32.mrf.mxu0
    %v117 = vadd.f32 0.0, %v116
    %118 = vdwg.mxu0
    %v119 = vmul.f32 %v111, %v111
    %v120 = vmul.f32 %v115, %v115
    %v121 = vmul.f32 %v113, %v113
    %v122 = vmul.f32 %v117, %v117
    %v123 = vadd.f32 %v119, %v121
    %v124 = vadd.f32 %v120, %v122
    %v125 = vpack.c.bf16 %v124, %v123
    %v126 = vld [vmem:[#allocation7] sm:$0xf]
    %v127 = vld [vmem:[#allocation7 + $0x4] sm:$0xf]
    %v128 = vld [vmem:[#allocation7 + $0x8] sm:$0xf]
    %v129 = vld [vmem:[#allocation7 + $0xc] sm:$0xf]
    %v130 = vld [vmem:[#allocation7 + $0x10] sm:$0xf]
    %v131 = vld [vmem:[#allocation7 + $0x14] sm:$0xf]
    %v132 = vld [vmem:[#allocation7 + $0x18] sm:$0xf]
    %v133 = vld [vmem:[#allocation7 + $0x1c] sm:$0xf]
    %v134 = vld [vmem:[#allocation7 + $0x20] sm:$0xf]
    %v135 = vld [vmem:[#allocation7 + $0x24] sm:$0xf]
    %v136 = vld [vmem:[#allocation7 + $0x28] sm:$0xf]
    %v137 = vld [vmem:[#allocation7 + $0x2c] sm:$0xf]
    %v138 = vld [vmem:[#allocation7 + $0x30] sm:$0xf]
    %v139 = vld [vmem:[#allocation7 + $0x34] sm:$0xf]
    %v140 = vld [vmem:[#allocation7 + $0x38] sm:$0xf]
    %v141 = vld [vmem:[#allocation7 + $0x3c] sm:$0xf]
    %v158 = vunpack.c.l.b16 %v126
    %v159 = vunpack.c.l.b16 %v127
    %v160 = vunpack.c.l.b16 %v128
    %v161 = vunpack.c.l.b16 %v129
    %v162 = vunpack.c.l.b16 %v130
    %v163 = vunpack.c.l.b16 %v131
    %v164 = vunpack.c.l.b16 %v132
    %v165 = vunpack.c.l.b16 %v133
    %v166 = vunpack.c.l.b16 %v134
    %v167 = vunpack.c.l.b16 %v135
    %v168 = vunpack.c.l.b16 %v136
    %v169 = vunpack.c.l.b16 %v137
    %v170 = vunpack.c.l.b16 %v138
    %v171 = vunpack.c.l.b16 %v139
    %v172 = vunpack.c.l.b16 %v140
    %v173 = vunpack.c.l.b16 %v141
    %v174 = vpack.c.b16 %v159, %v158
    %v175 = vpack.c.b16 %v161, %v160
    %v176 = vpack.c.b16 %v163, %v162
    %v177 = vpack.c.b16 %v165, %v164
    %v178 = vpack.c.b16 %v167, %v166
    %v179 = vpack.c.b16 %v169, %v168
    %v180 = vpack.c.b16 %v171, %v170
    %v181 = vpack.c.b16 %v173, %v172
    %190 = vmatprep.subr.bf16.mxu0 0
    %191 = vmatpush1.bf16.msra.mxu0 %v181
    %192 = vmatprep.subr.bf16.mxu0 0
    %193 = vmatpush1.bf16.msra.mxu0 %v180
    %194 = vmatprep.subr.bf16.mxu0 0
    %195 = vmatpush1.bf16.msra.mxu0 %v179
    %196 = vmatprep.subr.bf16.mxu0 0
    %197 = vmatpush1.bf16.msra.mxu0 %v178
    %198 = vmatprep.subr.bf16.mxu0 0
    %199 = vmatpush1.bf16.msra.mxu0 %v177
    %200 = vmatprep.subr.bf16.mxu0 0
    %201 = vmatpush1.bf16.msra.mxu0 %v176
    %202 = vmatprep.subr.bf16.mxu0 0
    %203 = vmatpush1.bf16.msra.mxu0 %v175
    %204 = vmatprep.subr.bf16.mxu0 0
    %205 = vmatpush1.bf16.msra.mxu0 %v174
    %206 = vmatprep.subr.bf16.mxu0 0
    %207 = vmatpush2.bf16.msra.mxu0 0
    %208 = vmatprep.subr.bf16.mxu0 0
    %209 = vmatpush2.bf16.msra.mxu0 0
    %210 = vmatprep.subr.bf16.mxu0 0
    %211 = vmatpush2.bf16.msra.mxu0 0
    %212 = vmatprep.subr.bf16.mxu0 0
    %213 = vmatpush2.bf16.msra.mxu0 0
    %214 = vmatprep.subr.bf16.mxu0 0
    %215 = vmatpush2.bf16.msra.mxu0 0
    %216 = vmatprep.subr.bf16.mxu0 0
    %217 = vmatpush2.bf16.msra.mxu0 0
    %218 = vmatprep.subr.bf16.mxu0 0
    %219 = vmatpush2.bf16.msra.mxu0 0
    %220 = vmatprep.subr.bf16.mxu0 0
    %221 = vmatpush2.bf16.msra.mxu0 0
    %222 = vmatprep.mubr.bf16.mxu0 0
    %223 = vmatmul.mubr.bf16.gmra.mxu0 %v125
    %v224 = vpop.f32.mrf.mxu0
    %v225 = vadd.f32 0.0, %v224
    %v226 = vpop.f32.mrf.mxu0
    %v227 = vpop.f32.mrf.mxu0
    %v228 = vadd.f32 0.0, %v227
    %v229 = vpop.f32.mrf.mxu0
    %230 = vdwg.mxu0
    %v231 = vpack.c.bf16 %v228, %v225
    %v233 = vunpack.c.l.b16 %v231
    %v234 = vunpack.c.h.b16 %v231
    %v235 = vpack.c.b16 %v233, %v233
    %v236 = vpack.c.b16 %v234, %v234
    %239 = vst [vmem:[#allocation8] sm:$0xf] %v235
    %240 = vst [vmem:[#allocation8 + $0xc] sm:$0xf] %v236
    %s241 = scalar_lea.vmem [#allocation5], 16
    %v242 = vld [vmem:[%s241] sm:$0xff]
    %v243 = vld [vmem:[%s241 + $0x8] sm:$0xff]
    %v246 = vunpack.c.l.b16 %v242
    %v247 = vunpack.c.h.b16 %v242
    %v248 = vunpack.c.l.b16 %v243
    %v249 = vunpack.c.h.b16 %v243
    %v250 = vpack.c.b16 %v248, %v246
    %v251 = vpack.c.b16 %v249, %v247
    %254 = vmatprep.subr.bf16.mxu0 0
    %255 = vmatpush1.bf16.msra.mxu0 0
    %256 = vmatprep.subr.bf16.mxu0 0
    %257 = vmatpush1.bf16.msra.mxu0 0
    %258 = vmatprep.subr.bf16.mxu0 0
    %259 = vmatpush1.bf16.msra.mxu0 0
    %260 = vmatprep.subr.bf16.mxu0 0
    %261 = vmatpush1.bf16.msra.mxu0 0
    %262 = vmatprep.subr.bf16.mxu0 0
    %263 = vmatpush1.bf16.msra.mxu0 0
    %264 = vmatprep.subr.bf16.mxu0 0
    %265 = vmatpush1.bf16.msra.mxu0 0
    %266 = vmatprep.subr.bf16.mxu0 0
    %267 = vmatpush1.bf16.msra.mxu0 0
    %268 = vmatprep.subr.bf16.mxu0 %v251
    %269 = vmatpush1.bf16.msra.mxu0 %v250
    %270 = vmatprep.subr.bf16.mxu0 0
    %271 = vmatpush2.bf16.msra.mxu0 0
    %272 = vmatprep.subr.bf16.mxu0 0
    %273 = vmatpush2.bf16.msra.mxu0 0
    %274 = vmatprep.subr.bf16.mxu0 0
    %275 = vmatpush2.bf16.msra.mxu0 0
    %276 = vmatprep.subr.bf16.mxu0 0
    %277 = vmatpush2.bf16.msra.mxu0 0
    %278 = vmatprep.subr.bf16.mxu0 0
    %279 = vmatpush2.bf16.msra.mxu0 0
    %280 = vmatprep.subr.bf16.mxu0 0
    %281 = vmatpush2.bf16.msra.mxu0 0
    %282 = vmatprep.subr.bf16.mxu0 0
    %283 = vmatpush2.bf16.msra.mxu0 0
    %284 = vmatprep.subr.bf16.mxu0 0
    %285 = vmatpush2.bf16.msra.mxu0 0
    %286 = vmatprep.mubr.bf16.mxu0 0
    %287 = vmatmul.mubr.bf16.gmra.mxu0 %v74
    %v288 = vpop.f32.mrf.mxu0
    %v289 = vadd.f32 0.0, %v288
    %v290 = vpop.f32.mrf.mxu0
    %v291 = vadd.f32 0.0, %v290
    %v292 = vpop.f32.mrf.mxu0
    %v293 = vadd.f32 0.0, %v292
    %v294 = vpop.f32.mrf.mxu0
    %v295 = vadd.f32 0.0, %v294
    %296 = vdwg.mxu0
    %v297 = vmul.f32 %v289, %v289
    %v298 = vmul.f32 %v293, %v293
    %v299 = vmul.f32 %v291, %v291
    %v300 = vmul.f32 %v295, %v295
    %v301 = vadd.f32 %v297, %v299
    %v302 = vadd.f32 %v298, %v300
    %v303 = vpack.c.bf16 %v302, %v301
    %v304 = vld [vmem:[#allocation7] sm:$0xf]
    %v305 = vld [vmem:[#allocation7 + $0x4] sm:$0xf]
    %v306 = vld [vmem:[#allocation7 + $0x8] sm:$0xf]
    %v307 = vld [vmem:[#allocation7 + $0xc] sm:$0xf]
    %v308 = vld [vmem:[#allocation7 + $0x10] sm:$0xf]
    %v309 = vld [vmem:[#allocation7 + $0x14] sm:$0xf]
    %v310 = vld [vmem:[#allocation7 + $0x18] sm:$0xf]
    %v311 = vld [vmem:[#allocation7 + $0x1c] sm:$0xf]
    %v312 = vld [vmem:[#allocation7 + $0x20] sm:$0xf]
    %v313 = vld [vmem:[#allocation7 + $0x24] sm:$0xf]
    %v314 = vld [vmem:[#allocation7 + $0x28] sm:$0xf]
    %v315 = vld [vmem:[#allocation7 + $0x2c] sm:$0xf]
    %v316 = vld [vmem:[#allocation7 + $0x30] sm:$0xf]
    %v317 = vld [vmem:[#allocation7 + $0x34] sm:$0xf]
    %v318 = vld [vmem:[#allocation7 + $0x38] sm:$0xf]
    %v319 = vld [vmem:[#allocation7 + $0x3c] sm:$0xf]
    %v336 = vunpack.c.l.b16 %v304
    %v337 = vunpack.c.l.b16 %v305
    %v338 = vunpack.c.l.b16 %v306
    %v339 = vunpack.c.l.b16 %v307
    %v340 = vunpack.c.l.b16 %v308
    %v341 = vunpack.c.l.b16 %v309
    %v342 = vunpack.c.l.b16 %v310
    %v343 = vunpack.c.l.b16 %v311
    %v344 = vunpack.c.l.b16 %v312
    %v345 = vunpack.c.l.b16 %v313
    %v346 = vunpack.c.l.b16 %v314
    %v347 = vunpack.c.l.b16 %v315
    %v348 = vunpack.c.l.b16 %v316
    %v349 = vunpack.c.l.b16 %v317
    %v350 = vunpack.c.l.b16 %v318
    %v351 = vunpack.c.l.b16 %v319
    %v352 = vpack.c.b16 %v337, %v336
    %v353 = vpack.c.b16 %v339, %v338
    %v354 = vpack.c.b16 %v341, %v340
    %v355 = vpack.c.b16 %v343, %v342
    %v356 = vpack.c.b16 %v345, %v344
    %v357 = vpack.c.b16 %v347, %v346
    %v358 = vpack.c.b16 %v349, %v348
    %v359 = vpack.c.b16 %v351, %v350
    %368 = vmatprep.subr.bf16.mxu0 0
    %369 = vmatpush1.bf16.msra.mxu0 %v359
    %370 = vmatprep.subr.bf16.mxu0 0
    %371 = vmatpush1.bf16.msra.mxu0 %v358
    %372 = vmatprep.subr.bf16.mxu0 0
    %373 = vmatpush1.bf16.msra.mxu0 %v357
    %374 = vmatprep.subr.bf16.mxu0 0
    %375 = vmatpush1.bf16.msra.mxu0 %v356
    %376 = vmatprep.subr.bf16.mxu0 0
    %377 = vmatpush1.bf16.msra.mxu0 %v355
    %378 = vmatprep.subr.bf16.mxu0 0
    %379 = vmatpush1.bf16.msra.mxu0 %v354
    %380 = vmatprep.subr.bf16.mxu0 0
    %381 = vmatpush1.bf16.msra.mxu0 %v353
    %382 = vmatprep.subr.bf16.mxu0 0
    %383 = vmatpush1.bf16.msra.mxu0 %v352
    %384 = vmatprep.subr.bf16.mxu0 0
    %385 = vmatpush2.bf16.msra.mxu0 0
    %386 = vmatprep.subr.bf16.mxu0 0
    %387 = vmatpush2.bf16.msra.mxu0 0
    %388 = vmatprep.subr.bf16.mxu0 0
    %389 = vmatpush2.bf16.msra.mxu0 0
    %390 = vmatprep.subr.bf16.mxu0 0
    %391 = vmatpush2.bf16.msra.mxu0 0
    %392 = vmatprep.subr.bf16.mxu0 0
    %393 = vmatpush2.bf16.msra.mxu0 0
    %394 = vmatprep.subr.bf16.mxu0 0
    %395 = vmatpush2.bf16.msra.mxu0 0
    %396 = vmatprep.subr.bf16.mxu0 0
    %397 = vmatpush2.bf16.msra.mxu0 0
    %398 = vmatprep.subr.bf16.mxu0 0
    %399 = vmatpush2.bf16.msra.mxu0 0
    %400 = vmatprep.mubr.bf16.mxu0 0
    %401 = vmatmul.mubr.bf16.gmra.mxu0 %v303
    %v402 = vpop.f32.mrf.mxu0
    %v403 = vadd.f32 0.0, %v402
    %v404 = vpop.f32.mrf.mxu0
    %v405 = vpop.f32.mrf.mxu0
    %v406 = vadd.f32 0.0, %v405
    %v407 = vpop.f32.mrf.mxu0
    %408 = vdwg.mxu0
    %v409 = vpack.c.bf16 %v406, %v403
    %v411 = vunpack.c.l.b16 %v409
    %v412 = vunpack.c.h.b16 %v409
    %v413 = vpack.c.b16 %v411, %v411
    %v414 = vpack.c.b16 %v412, %v412
    %417 = vst [vmem:[#allocation8 + $0x4] sm:$0xf] %v413
    %418 = vst [vmem:[#allocation8 + $0x10] sm:$0xf] %v414
    %s419 = scalar_lea.vmem [#allocation5], 32
    %v420 = vld [vmem:[%s419] sm:$0xff]
    %v421 = vld [vmem:[%s419 + $0x8] sm:$0xff]
    %v424 = vunpack.c.l.b16 %v420
    %v425 = vunpack.c.h.b16 %v420
    %v426 = vunpack.c.l.b16 %v421
    %v427 = vunpack.c.h.b16 %v421
    %v428 = vpack.c.b16 %v426, %v424
    %v429 = vpack.c.b16 %v427, %v425
    %432 = vmatprep.subr.bf16.mxu0 0
    %433 = vmatpush1.bf16.msra.mxu0 0
    %434 = vmatprep.subr.bf16.mxu0 0
    %435 = vmatpush1.bf16.msra.mxu0 0
    %436 = vmatprep.subr.bf16.mxu0 0
    %437 = vmatpush1.bf16.msra.mxu0 0
    %438 = vmatprep.subr.bf16.mxu0 0
    %439 = vmatpush1.bf16.msra.mxu0 0
    %440 = vmatprep.subr.bf16.mxu0 0
    %441 = vmatpush1.bf16.msra.mxu0 0
    %442 = vmatprep.subr.bf16.mxu0 0
    %443 = vmatpush1.bf16.msra.mxu0 0
    %444 = vmatprep.subr.bf16.mxu0 0
    %445 = vmatpush1.bf16.msra.mxu0 0
    %446 = vmatprep.subr.bf16.mxu0 %v429
    %447 = vmatpush1.bf16.msra.mxu0 %v428
    %448 = vmatprep.subr.bf16.mxu0 0
    %449 = vmatpush2.bf16.msra.mxu0 0
    %450 = vmatprep.subr.bf16.mxu0 0
    %451 = vmatpush2.bf16.msra.mxu0 0
    %452 = vmatprep.subr.bf16.mxu0 0
    %453 = vmatpush2.bf16.msra.mxu0 0
    %454 = vmatprep.subr.bf16.mxu0 0
    %455 = vmatpush2.bf16.msra.mxu0 0
    %456 = vmatprep.subr.bf16.mxu0 0
    %457 = vmatpush2.bf16.msra.mxu0 0
    %458 = vmatprep.subr.bf16.mxu0 0
    %459 = vmatpush2.bf16.msra.mxu0 0
    %460 = vmatprep.subr.bf16.mxu0 0
    %461 = vmatpush2.bf16.msra.mxu0 0
    %462 = vmatprep.subr.bf16.mxu0 0
    %463 = vmatpush2.bf16.msra.mxu0 0
    %464 = vmatprep.mubr.bf16.mxu0 0
    %465 = vmatmul.mubr.bf16.gmra.mxu0 %v74
    %v466 = vpop.f32.mrf.mxu0
    %v467 = vadd.f32 0.0, %v466
    %v468 = vpop.f32.mrf.mxu0
    %v469 = vadd.f32 0.0, %v468
    %v470 = vpop.f32.mrf.mxu0
    %v471 = vadd.f32 0.0, %v470
    %v472 = vpop.f32.mrf.mxu0
    %v473 = vadd.f32 0.0, %v472
    %474 = vdwg.mxu0
    %v475 = vmul.f32 %v467, %v467
    %v476 = vmul.f32 %v471, %v471
    %v477 = vmul.f32 %v469, %v469
    %v478 = vmul.f32 %v473, %v473
    %v479 = vadd.f32 %v475, %v477
    %v480 = vadd.f32 %v476, %v478
    %v481 = vpack.c.bf16 %v480, %v479
    %v482 = vld [vmem:[#allocation7] sm:$0xf]
    %v483 = vld [vmem:[#allocation7 + $0x4] sm:$0xf]
    %v484 = vld [vmem:[#allocation7 + $0x8] sm:$0xf]
    %v485 = vld [vmem:[#allocation7 + $0xc] sm:$0xf]
    %v486 = vld [vmem:[#allocation7 + $0x10] sm:$0xf]
    %v487 = vld [vmem:[#allocation7 + $0x14] sm:$0xf]
    %v488 = vld [vmem:[#allocation7 + $0x18] sm:$0xf]
    %v489 = vld [vmem:[#allocation7 + $0x1c] sm:$0xf]
    %v490 = vld [vmem:[#allocation7 + $0x20] sm:$0xf]
    %v491 = vld [vmem:[#allocation7 + $0x24] sm:$0xf]
    %v492 = vld [vmem:[#allocation7 + $0x28] sm:$0xf]
    %v493 = vld [vmem:[#allocation7 + $0x2c] sm:$0xf]
    %v494 = vld [vmem:[#allocation7 + $0x30] sm:$0xf]
    %v495 = vld [vmem:[#allocation7 + $0x34] sm:$0xf]
    %v496 = vld [vmem:[#allocation7 + $0x38] sm:$0xf]
    %v497 = vld [vmem:[#allocation7 + $0x3c] sm:$0xf]
    %v514 = vunpack.c.l.b16 %v482
    %v515 = vunpack.c.l.b16 %v483
    %v516 = vunpack.c.l.b16 %v484
    %v517 = vunpack.c.l.b16 %v485
    %v518 = vunpack.c.l.b16 %v486
    %v519 = vunpack.c.l.b16 %v487
    %v520 = vunpack.c.l.b16 %v488
    %v521 = vunpack.c.l.b16 %v489
    %v522 = vunpack.c.l.b16 %v490
    %v523 = vunpack.c.l.b16 %v491
    %v524 = vunpack.c.l.b16 %v492
    %v525 = vunpack.c.l.b16 %v493
    %v526 = vunpack.c.l.b16 %v494
    %v527 = vunpack.c.l.b16 %v495
    %v528 = vunpack.c.l.b16 %v496
    %v529 = vunpack.c.l.b16 %v497
    %v530 = vpack.c.b16 %v515, %v514
    %v531 = vpack.c.b16 %v517, %v516
    %v532 = vpack.c.b16 %v519, %v518
    %v533 = vpack.c.b16 %v521, %v520
    %v534 = vpack.c.b16 %v523, %v522
    %v535 = vpack.c.b16 %v525, %v524
    %v536 = vpack.c.b16 %v527, %v526
    %v537 = vpack.c.b16 %v529, %v528
    %546 = vmatprep.subr.bf16.mxu0 0
    %547 = vmatpush1.bf16.msra.mxu0 %v537
    %548 = vmatprep.subr.bf16.mxu0 0
    %549 = vmatpush1.bf16.msra.mxu0 %v536
    %550 = vmatprep.subr.bf16.mxu0 0
    %551 = vmatpush1.bf16.msra.mxu0 %v535
    %552 = vmatprep.subr.bf16.mxu0 0
    %553 = vmatpush1.bf16.msra.mxu0 %v534
    %554 = vmatprep.subr.bf16.mxu0 0
    %555 = vmatpush1.bf16.msra.mxu0 %v533
    %556 = vmatprep.subr.bf16.mxu0 0
    %557 = vmatpush1.bf16.msra.mxu0 %v532
    %558 = vmatprep.subr.bf16.mxu0 0
    %559 = vmatpush1.bf16.msra.mxu0 %v531
    %560 = vmatprep.subr.bf16.mxu0 0
    %561 = vmatpush1.bf16.msra.mxu0 %v530
    %562 = vmatprep.subr.bf16.mxu0 0
    %563 = vmatpush2.bf16.msra.mxu0 0
    %564 = vmatprep.subr.bf16.mxu0 0
    %565 = vmatpush2.bf16.msra.mxu0 0
    %566 = vmatprep.subr.bf16.mxu0 0
    %567 = vmatpush2.bf16.msra.mxu0 0
    %568 = vmatprep.subr.bf16.mxu0 0
    %569 = vmatpush2.bf16.msra.mxu0 0
    %570 = vmatprep.subr.bf16.mxu0 0
    %571 = vmatpush2.bf16.msra.mxu0 0
    %572 = vmatprep.subr.bf16.mxu0 0
    %573 = vmatpush2.bf16.msra.mxu0 0
    %574 = vmatprep.subr.bf16.mxu0 0
    %575 = vmatpush2.bf16.msra.mxu0 0
    %576 = vmatprep.subr.bf16.mxu0 0
    %577 = vmatpush2.bf16.msra.mxu0 0
    %578 = vmatprep.mubr.bf16.mxu0 0
    %579 = vmatmul.mubr.bf16.gmra.mxu0 %v481
    %v580 = vpop.f32.mrf.mxu0
    %v581 = vadd.f32 0.0, %v580
    %v582 = vpop.f32.mrf.mxu0
    %v583 = vpop.f32.mrf.mxu0
    %v584 = vadd.f32 0.0, %v583
    %v585 = vpop.f32.mrf.mxu0
    %586 = vdwg.mxu0
    %v587 = vpack.c.bf16 %v584, %v581
    %v589 = vunpack.c.l.b16 %v587
    %v590 = vunpack.c.h.b16 %v587
    %v591 = vpack.c.b16 %v589, %v589
    %v592 = vpack.c.b16 %v590, %v590
    %595 = vst [vmem:[#allocation8 + $0x8] sm:$0xf] %v591
    %596 = vst [vmem:[#allocation8 + $0x14] sm:$0xf] %v592
    // Predicated region
    $region26: #{tpu_custom_call.1} parent=1 // pred_check
      _
    $region27: #{tpu_custom_call.1} parent=1 // pred_check_branch
      %598 = sbr.rel (0) target = $region29
    $region28: #{tpu_custom_call.1} parent=1 // pred_region
      %s600 = ssub.s32 384, 384
      %601 = vsyncadd [#allocation4], %s600
      %s602 = sshll.u32 [#allocation8], 4
      %s603 = int_to_ptr.vmem [resolvable:$true] %s602
      %608 = dma.vmem_to_hbm [thread:$0]  %s603, 384, %s3, [#allocation4], 192, 192, 12
    $region29: #{tpu_custom_call.1} parent=1 // pred_fallthru
      _
    // Predicated region
    $region30: #{tpu_custom_call.1} parent=1 // pred_check
      _
    $region31: #{tpu_custom_call.1} parent=1 // pred_check_branch
      %610 = sbr.rel (0) target = $region33
    $region32: #{tpu_custom_call.1} parent=1 // pred_region
      %611 = dma.done [#allocation4], 384
    $region33: #{tpu_custom_call.1} parent=1 // pred_fallthru
      _
    %612 = vsyncpa [#allocation3], 1
    %613 = vsyncpa [#allocation6], 1
    %614 = vsyncpa [#allocation4], 1

</llo_original>
